<compile_context>
chip_gen: v7x
topology: tpu7x:2x2x1
jax: 0.10.0
libtpu: 0.0.40
codegen_flags: <defaults>
</compile_context>

<pallas_src>
import jax
import jax.numpy as jnp
from jax.experimental import pallas as pl
from jax.experimental.pallas import tpu as pltpu

HIDDEN = 60
OUT = 1


def _round_up(x, m):
    return (x + m - 1) // m * m


def _round_down(x, m):
    return x // m * m


def fuse_params(w1, b1, w2, b2):
    """Collapse the two bias-only Linear layers: y = x @ w_fused + b_fused."""
    hp = jax.lax.Precision.HIGHEST
    w_fused = jnp.dot(w1, w2, precision=hp)            # (D, 1)
    b_fused = jnp.dot(b1, w2, precision=hp) + b2        # (1, 1)
    return w_fused.astype(jnp.float32), b_fused.astype(jnp.float32)


def fused_mlp_kernel(x_ref, w_ref, b_ref, o_ref):
    # x_ref: (tb, D) f32  -- streamed straight from the original x (no prepass)
    # w_ref: (1, D)  f32  -- resident fused weight row (sublane-broadcast)
    # b_ref: (1, 1)  f32  -- fused scalar bias, in SMEM
    # o_ref: (tb, 1) f32
    logits = jnp.sum(x_ref[...] * w_ref[...], axis=1, keepdims=True)  # VPU mul + lane reduce
    o_ref[...] = jax.nn.sigmoid(logits + b_ref[0, 0]).astype(o_ref.dtype)


def my_network_forward(x, w1, b1, w2, b2, *,
                       target_tile_bytes=4 << 20,
                       min_kernel_batch=512):
    """x: (B, D) float32.  Returns (B, 1) float32, matching MyNetwork.forward."""
    B, D = x.shape
    hp = jax.lax.Precision.HIGHEST

    # --- fuse the two Linears outside the kernel (one-time, tiny) ---
    w_fused, b_fused = fuse_params(w1, b1, w2, b2)

    # --- small-batch fallback: launch overhead dominates, XLA path is faster ---
    if B < min_kernel_batch:
        return jax.nn.sigmoid(jnp.dot(x, w_fused, precision=hp) + b_fused)

    # --- batch tile: ~target_tile_bytes of f32 x per grid step, multiple of
    #     128 rows, capped at ~B/2 so the parallel grid has >=2 steps (v7x
    #     megacore sharding).  Partial last block is handled by Pallas; the
    #     out-of-range output rows are simply masked on store. ---
    tb = max(128, _round_down(target_tile_bytes // (D * 4), 128))
    tb = min(tb, max(128, _round_down(B // 2, 128)))
    grid = (pl.cdiv(B, tb),)

    # Explicit VMEM budget (double-buffered x + out tiles, weight, headroom);
    # matters on v5e's 16 MiB default scoped limit once tiles get large.
    x_tile_bytes = tb * D * 4
    out_tile_bytes = tb * 4
    vmem_needed = 2 * x_tile_bytes + 2 * out_tile_bytes + D * 4
    vmem_limit = int(min(32 << 20, max(8 << 20, 2 * vmem_needed)))

    cost = pl.CostEstimate(
        flops=2 * B * D + 2 * B,
        transcendentals=B,
        bytes_accessed=B * D * 4 + B * 4 + D * 4,
    )

    out = pl.pallas_call(
        fused_mlp_kernel,
        out_shape=jax.ShapeDtypeStruct((B, OUT), jnp.float32),
        grid=grid,
        in_specs=[
            pl.BlockSpec((tb, D), lambda i: (i, 0)),              # streamed x tile
            pl.BlockSpec((1, D), lambda i: (0, 0)),               # resident fused weight row
            pl.BlockSpec(memory_space=pltpu.MemorySpace.SMEM),    # scalar fused bias
        ],
        out_specs=pl.BlockSpec((tb, OUT), lambda i: (i, 0)),
        compiler_params=pltpu.CompilerParams(
            dimension_semantics=("parallel",),                    # megacore on v7x
            vmem_limit_bytes=vmem_limit,
        ),
        cost_estimate=cost,
    )(x, w_fused.T, b_fused)

    return out


def init_params(key, input_dim):
    # Deterministic init mimicking PyTorch nn.Linear defaults:
    # U(-1/sqrt(fan_in), 1/sqrt(fan_in)) for both weight and bias.
    k1, k2, k3, k4 = jax.random.split(key, 4)
    bound1 = 1.0 / jnp.sqrt(jnp.float32(input_dim))
    w1 = jax.random.uniform(k1, (input_dim, HIDDEN), jnp.float32, -bound1, bound1)
    b1 = jax.random.uniform(k2, (1, HIDDEN), jnp.float32, -bound1, bound1)
    bound2 = 1.0 / jnp.sqrt(jnp.float32(HIDDEN))
    w2 = jax.random.uniform(k3, (HIDDEN, OUT), jnp.float32, -bound2, bound2)
    b2 = jax.random.uniform(k4, (1, OUT), jnp.float32, -bound2, bound2)
    return w1, b1, w2, b2


if __name__ == "__main__":
    key = jax.random.PRNGKey(0)
    k_x, k_x2, k_p = jax.random.split(key, 3)

    input_dim = 32
    w1, b1, w2, b2 = init_params(k_p, input_dim)
    hp = jax.lax.Precision.HIGHEST

    # 1) Kernel path: batch large enough to exercise the tiled pallas_call,
    #    a >=2-step parallel grid and a partial final block.
    batch = 2000
    x = jax.random.normal(k_x, (batch, input_dim), jnp.float32)
    out = jax.block_until_ready(my_network_forward(x, w1, b1, w2, b2))
    assert out.shape == (batch, OUT)

    ref = jax.nn.sigmoid(
        jnp.dot(jnp.dot(x, w1, precision=hp) + b1, w2, precision=hp) + b2)
    assert jnp.allclose(out, ref, atol=5e-5), float(jnp.max(jnp.abs(out - ref)))

    # 2) Small-batch fallback path (plain XLA, no kernel launch).
    batch_small = 8
    xs = jax.random.normal(k_x2, (batch_small, input_dim), jnp.float32)
    outs = jax.block_until_ready(my_network_forward(xs, w1, b1, w2, b2))
    refs = jax.nn.sigmoid(
        jnp.dot(jnp.dot(xs, w1, precision=hp) + b1, w2, precision=hp) + b2)
    assert outs.shape == (batch_small, OUT)
    assert jnp.allclose(outs, refs, atol=5e-5), float(jnp.max(jnp.abs(outs - refs)))

    print("KERNEL_OK")
</pallas_src>

<mosaic_0001>
module attributes {stable_mosaic.version = 11 : i64} {
  func.func @fused_mlp_kernel(%arg0: i32, %arg1: memref<896x32xf32, #tpu.memory_space<vmem>>, %arg2: memref<1x32xf32, #tpu.memory_space<vmem>>, %arg3: memref<1x1xf32, #tpu.memory_space<smem>>, %arg4: memref<896x1xf32, #tpu.memory_space<vmem>>) attributes {dimension_semantics = [#tpu.dimension_semantics<parallel>], iteration_bounds = array<i64: 3>, scalar_prefetch = 0 : i64, scratch_operands = 0 : i64, tpu.core_type = #tpu.core_type<tc>, window_params = [{transform_indices = @transform_0, window_bounds = array<i64: 896, 32>}, {pipeline_mode = #tpu.pipeline_mode<synchronous>, transform_indices = @transform_1, window_bounds = array<i64: 1, 32>}, {transform_indices = @transform_2, window_bounds = array<i64: 1, 1>}, {transform_indices = @transform_3, window_bounds = array<i64: 896, 1>}]} {
    %c0 = arith.constant 0 : index
    %c0_0 = arith.constant 0 : index
    %0 = vector.load %arg1[%c0, %c0_0] : memref<896x32xf32, #tpu.memory_space<vmem>>, vector<896x32xf32>
    %c0_1 = arith.constant 0 : index
    %c0_2 = arith.constant 0 : index
    %1 = vector.load %arg2[%c0_1, %c0_2] : memref<1x32xf32, #tpu.memory_space<vmem>>, vector<1x32xf32>
    %2 = vector.broadcast %1 : vector<1x32xf32> to vector<896x32xf32>
    %3 = arith.mulf %0, %2 : vector<896x32xf32>
    %cst = arith.constant dense<0.000000e+00> : vector<896xf32>
    %4 = vector.multi_reduction <add>, %3, %cst [1] : vector<896x32xf32> to vector<896xf32>
    %5 = vector.shape_cast %4 : vector<896xf32> to vector<896x1xf32>
    %c0_3 = arith.constant 0 : index
    %c0_4 = arith.constant 0 : index
    %6 = memref.load %arg3[%c0_3, %c0_4] : memref<1x1xf32, #tpu.memory_space<smem>>
    %7 = vector.broadcast %6 : f32 to vector<896x1xf32>
    %8 = arith.addf %5, %7 : vector<896x1xf32>
    %9 = arith.negf %8 : vector<896x1xf32>
    %10 = math.exp %9 : vector<896x1xf32>
    %cst_5 = arith.constant 1.000000e+00 : f32
    %11 = vector.broadcast %cst_5 : f32 to vector<896x1xf32>
    %12 = arith.addf %11, %10 : vector<896x1xf32>
    %13 = arith.divf %11, %12 : vector<896x1xf32>
    %c0_6 = arith.constant 0 : index
    %c0_7 = arith.constant 0 : index
    %14 = vector.load %arg4[%c0_6, %c0_7] : memref<896x1xf32, #tpu.memory_space<vmem>>, vector<896x1xf32>
    tpu.vector_store %arg4[%c0_6, %c0_7], %13 {strides = array<i32>} : memref<896x1xf32, #tpu.memory_space<vmem>>, vector<896x1xf32>,
    return
  }
  func.func @transform_0(%arg0: i32) -> (i32, i32) {
    %c0_i32 = arith.constant 0 : i32
    %c0_i32_0 = arith.constant 0 : i32
    return %arg0, %c0_i32 : i32, i32
  }
  func.func @transform_1(%arg0: i32) -> (i32, i32) {
    %c0_i32 = arith.constant 0 : i32
    %c0_i32_0 = arith.constant 0 : i32
    %c0_i32_1 = arith.constant 0 : i32
    return %c0_i32, %c0_i32_0 : i32, i32
  }
  func.func @transform_2(%arg0: i32) -> (i32, i32) {
    %c0_i32 = arith.constant 0 : i32
    %c0_i32_0 = arith.constant 0 : i32
    %c0_i32_1 = arith.constant 0 : i32
    return %c0_i32, %c0_i32_0 : i32, i32
  }
  func.func @transform_3(%arg0: i32) -> (i32, i32) {
    %c0_i32 = arith.constant 0 : i32
    %c0_i32_0 = arith.constant 0 : i32
    return %arg0, %c0_i32 : i32, i32
  }
}

</mosaic_0001>

<llo_original>
// kernel: tpu_custom_call.1
$region0: #{tpu_custom_call.1}
  #allocation0 [shape = 'u32[]', space=smem, size = 0x4, offset = 0x4, fixed_abs, tag = 'smem constant byte address 0x4 - core index']
  #allocation1 [shape = 'u32[144,128]{1,0:T(1,128)}', space=vmem, size = 0x12000, scoped, tag = 'internal scratch']
  #allocation2 [shape = 'f32[1,1]{1,0:T(1,128)S(6)}', space=smem, size = 0x200, scoped, tag = 'scoped memory for tpu_custom_call.1']
  %s0 = inlined_call_operand.vmem [shape: f32[2000,32], index: 0, kind: input, shape index: {}]
  %s1 = inlined_call_operand.vmem [shape: f32[1,32], index: 1, kind: input, shape index: {}]
  %s2 = inlined_call_operand.<no memory space> [shape: f32[1,1], index: 2, kind: input, shape index: {}]
  %s3 = inlined_call_operand.vmem [shape: f32[2000,1], index: 3, kind: output, shape index: {}]
  %s4 = sld [smem:[#allocation0]]
  $region93: #{tpu_custom_call.1} parent=0
    _
  %s6 = ssub.s32 1, %s4
  %s7 = scalar_select 0, %s6, %s4
  %8 = sst [smem:[#allocation2]] %s2
  $region1: #{tpu_custom_call.1} parent=0
    #allocation3 [shape = 'u8[917504]{0}', space=vmem, size = 0xe0000, scoped, tag = 'output window, operand 0']
    loop: start=0, step=1, limit=5
    $region2: #{tpu_custom_call.1} parent=1 // loop_pre_header
      _
    $region3: #{tpu_custom_call.1} parent=1 // loop_header
      %s10 = sphi 0, %s14
      %p11 = scmp.ge.s32.totalorder %s10, 5
      %s20 = sphi 0, %s22
      %s23 = sphi 0, %s20
      %s24 = sphi 0, %s23
      %s40 = sphi 0, %s24
      %s44 = sphi 0, %s44
      %s46 = sphi 0, %s44
      %s47 = sphi 0, %s46
      %s61 = sphi 0, %s47
      %s65 = sphi 0, %s65
      %s67 = sphi 0, %s65
      %s68 = sphi 0, %s67
      %s82 = sphi 0, %s68
      %s88 = sphi 0, %s90
      %s91 = sphi 0, %s88
      %s92 = sphi 0, %s91
      %s108 = sphi 0, %s92
    $region4: #{tpu_custom_call.1} parent=1 // loop_header_branch
      %13 = sbr.rel (%p11) target = $region8
    $region5: #{tpu_custom_call.1} parent=1 // loop_body
      %s15 = ssub.s32 %s10, 1
      %s16 = ssub.s32 %s10, 2
      %s17 = sadd.s32 %s10, 1
      %s18 = ssub.s32 %s10, %s17
      %p19 = scmp.eq.s32.totalorder %s18, 0
      %s21 = sadd.s32 %s20, 1
      %s22 = scalar_select %p19, %s20, %s21
      %p25 = pneg %p19
      %p26 = scmp.eq.s32.totalorder %s10, 2
      %p27 = por %p25, %p26
      %p28 = scmp.ne.s32.totalorder %s20, %s23
      %p29 = scmp.eq.s32.totalorder %s10, 0
      %p30 = por %p28, %p29
      %p31 = scmp.ne.s32.totalorder %s20, %s23
      %p32 = scmp.eq.s32.totalorder %s15, 2
      %p33 = por %p31, %p32
      %p34 = scmp.ne.s32.totalorder %s23, %s24
      %p35 = scmp.eq.s32.totalorder %s15, 0
      %p36 = por %p34, %p35
      %p37 = scmp.ne.s32.totalorder %s23, %s24
      %p38 = scmp.eq.s32.totalorder %s16, 2
      %p39 = por %p37, %p38
      %p41 = scmp.ne.s32.totalorder %s24, %s40
      %p42 = scmp.eq.s32.totalorder %s16, 0
      %p43 = por %p41, %p42
      %s45 = sadd.s32 %s44, 1
      %p48 = scmp.eq.s32.totalorder %s10, 2
      %p49 = scmp.ne.s32.totalorder %s44, %s46
      %p50 = scmp.eq.s32.totalorder %s10, 0
      %p51 = por %p49, %p50
      %p52 = scmp.ne.s32.totalorder %s44, %s46
      %p53 = scmp.eq.s32.totalorder %s15, 2
      %p54 = por %p52, %p53
      %p55 = scmp.ne.s32.totalorder %s46, %s47
      %p56 = scmp.eq.s32.totalorder %s15, 0
      %p57 = por %p55, %p56
      %p58 = scmp.ne.s32.totalorder %s46, %s47
      %p59 = scmp.eq.s32.totalorder %s16, 2
      %p60 = por %p58, %p59
      %p62 = scmp.ne.s32.totalorder %s47, %s61
      %p63 = scmp.eq.s32.totalorder %s16, 0
      %p64 = por %p62, %p63
      %s66 = sadd.s32 %s65, 1
      %p69 = scmp.eq.s32.totalorder %s10, 2
      %p70 = scmp.ne.s32.totalorder %s65, %s67
      %p71 = scmp.eq.s32.totalorder %s10, 0
      %p72 = por %p70, %p71
      %p73 = scmp.ne.s32.totalorder %s65, %s67
      %p74 = scmp.eq.s32.totalorder %s15, 2
      %p75 = por %p73, %p74
      %p76 = scmp.ne.s32.totalorder %s67, %s68
      %p77 = scmp.eq.s32.totalorder %s15, 0
      %p78 = por %p76, %p77
      %p79 = scmp.ne.s32.totalorder %s67, %s68
      %p80 = scmp.eq.s32.totalorder %s16, 2
      %p81 = por %p79, %p80
      %p83 = scmp.ne.s32.totalorder %s68, %s82
      %p84 = scmp.eq.s32.totalorder %s16, 0
      %p85 = por %p83, %p84
      %s86 = ssub.s32 %s10, %s17
      %p87 = scmp.eq.s32.totalorder %s86, 0
      %s89 = sadd.s32 %s88, 1
      %s90 = scalar_select %p87, %s88, %s89
      %p93 = pneg %p87
      %p94 = scmp.eq.s32.totalorder %s10, 2
      %p95 = por %p93, %p94
      %p96 = scmp.ne.s32.totalorder %s88, %s91
      %p97 = scmp.eq.s32.totalorder %s10, 0
      %p98 = por %p96, %p97
      %p99 = scmp.ne.s32.totalorder %s88, %s91
      %p100 = scmp.eq.s32.totalorder %s15, 2
      %p101 = por %p99, %p100
      %p102 = scmp.ne.s32.totalorder %s91, %s92
      %p103 = scmp.eq.s32.totalorder %s15, 0
      %p104 = por %p102, %p103
      %p105 = scmp.ne.s32.totalorder %s91, %s92
      %p106 = scmp.eq.s32.totalorder %s16, 2
      %p107 = por %p105, %p106
      %p109 = scmp.ne.s32.totalorder %s92, %s108
      %p110 = scmp.eq.s32.totalorder %s16, 0
      %p111 = por %p109, %p110
      %p112 = scmp.le.s32.totalorder 1, %s10
      %p113 = scmp.lt.s32.totalorder %s10, 4
      %p114 = pnand %p112, %p113
      %p115 = pneg %p114
      // Predicated region
      $region9: #{tpu_custom_call.1} parent=5 // pred_check
        _
      $region10: #{tpu_custom_call.1} parent=5 // pred_check_branch
        %117 = sbr.rel (%p114) target = $region12
      $region11: #{tpu_custom_call.1} parent=5 // pred_region
        %s118 = ssub.s32 %s10, 1
        // Predicated region
        $region13: #{tpu_custom_call.1} parent=11 // pred_check
          %p119 = pneg %p57
        $region14: #{tpu_custom_call.1} parent=11 // pred_check_branch
          %121 = sbr.rel (%p119) target = $region16
        $region15: #{tpu_custom_call.1} parent=11 // pred_region
          _
        $region16: #{tpu_custom_call.1} parent=11 // pred_fallthru
          _
        // Predicated region
        $region17: #{tpu_custom_call.1} parent=11 // pred_check
          %p122 = pneg %p78
        $region18: #{tpu_custom_call.1} parent=11 // pred_check_branch
          %124 = sbr.rel (%p122) target = $region20
        $region19: #{tpu_custom_call.1} parent=11 // pred_region
          _
        $region20: #{tpu_custom_call.1} parent=11 // pred_fallthru
          _
      $region12: #{tpu_custom_call.1} parent=5 // pred_fallthru
        _
      %p125 = scmp.lt.s32.totalorder %s10, 3
      // Predicated region
      $region21: #{tpu_custom_call.1} parent=5 // pred_check
        %p126 = pneg %p125
      $region22: #{tpu_custom_call.1} parent=5 // pred_check_branch
        %128 = sbr.rel (%p126) target = $region24
      $region23: #{tpu_custom_call.1} parent=5 // pred_region
        // Predicated region
        $region25: #{tpu_custom_call.1} parent=23 // pred_check
          %p129 = pneg %p30
        $region26: #{tpu_custom_call.1} parent=23 // pred_check_branch
          %131 = sbr.rel (%p129) target = $region28
        $region27: #{tpu_custom_call.1} parent=23 // pred_region
          %s132 = smul.u32 112, %s10
          %s133 = ssub.s32 250, %s132
          %p134 = scmp.lt.s32.totalorder %s133, 112
          %s135 = scalar_select %p134, %s133, 112
          %s136 = smul.u32 128, %s135
          %p137 = scmp.lt.s32.totalorder %s132, 249
          %s138 = scalar_select %p137, %s132, 249
          %s139 = smul.addr %s138, 8
          %s140 = scalar_lea.vmem %s0, %s139
          %s141 = smul.u32 112, %s10
          %s142 = ssub.s32 250, %s141
          %p143 = scmp.lt.s32.totalorder %s142, 112
          %s144 = scalar_select %p143, %s142, 112
          %s145 = smul.u32 128, %s144
        $region28: #{tpu_custom_call.1} parent=23 // pred_fallthru
          _
      $region24: #{tpu_custom_call.1} parent=5 // pred_fallthru
        _
      %p146 = scmp.le.s32.totalorder 1, %s10
      %p147 = scmp.lt.s32.totalorder %s10, 4
      %p148 = pnand %p146, %p147
      %p149 = pneg %p148
      // Predicated region
      $region29: #{tpu_custom_call.1} parent=5 // pred_check
        _
      $region30: #{tpu_custom_call.1} parent=5 // pred_check_branch
        %151 = sbr.rel (%p148) target = $region32
      $region31: #{tpu_custom_call.1} parent=5 // pred_region
        %s152 = ssub.s32 %s10, 1
        %s153 = smul.u32 112, %s15
        %s154 = ssub.s32 250, %s153
        %p155 = scmp.lt.s32.totalorder %s154, 112
        %s156 = scalar_select %p155, %s154, 112
        %s157 = smul.u32 128, %s156
        %p158 = scmp.lt.s32.totalorder %s153, 249
        %s159 = scalar_select %p158, %s153, 249
        %s160 = smul.addr %s159, 8
        %s161 = scalar_lea.vmem %s0, %s160
        %p162 = pneg %p36
        %p163 = pneg %p33
        %p164 = pneg %p57
        %p165 = pneg %p54
        %p166 = pneg %p78
        %p167 = pneg %p75
        %p168 = pneg %p104
        %p169 = pneg %p101
        %s170 = sand.u32 %s91, 1
        %s171 = sand.u32 %s91, 1
        %s172 = smul.addr %s171, 896
        %s173 = scalar_lea.vmem [#allocation3], %s172
        %s174 = smul.u32 112, %s15
        %s175 = ssub.s32 250, %s174
        %p176 = scmp.lt.s32.totalorder %s175, 112
        %s177 = scalar_select %p176, %s175, 112
        %s178 = smul.u32 128, %s177
        %p179 = scmp.lt.s32.totalorder %s174, 249
        %s180 = scalar_select %p179, %s174, 249
        %s181 = smul.addr %s180, 8
        %s182 = scalar_lea.vmem %s0, %s181
        %s183 = smul.u32 112, %s15
        %s184 = ssub.s32 250, %s183
        %p185 = scmp.lt.s32.totalorder %s184, 112
        %s186 = scalar_select %p185, %s184, 112
        %s187 = smul.u32 128, %s186
        %s188 = smul.u32 112, %s15
        %s189 = ssub.s32 250, %s188
        %p190 = scmp.lt.s32.totalorder %s189, 112
        %s191 = scalar_select %p190, %s189, 112
        %s192 = smul.u32 128, %s191
        %v193 = vld [vmem:[%s182] sm:$0xff]
        %v194 = vld [vmem:[%s182 + $0x8] sm:$0xff]
        %v195 = vld [vmem:[%s182 + $0x10] sm:$0xff]
        %v196 = vld [vmem:[%s182 + $0x18] sm:$0xff]
        %v197 = vld [vmem:[%s182 + $0x20] sm:$0xff]
        %v198 = vld [vmem:[%s182 + $0x28] sm:$0xff]
        %v199 = vld [vmem:[%s182 + $0x30] sm:$0xff]
        %v200 = vld [vmem:[%s182 + $0x38] sm:$0xff]
        %v201 = vld [vmem:[%s182 + $0x40] sm:$0xff]
        %v202 = vld [vmem:[%s182 + $0x48] sm:$0xff]
        %v203 = vld [vmem:[%s182 + $0x50] sm:$0xff]
        %v204 = vld [vmem:[%s182 + $0x58] sm:$0xff]
        %v205 = vld [vmem:[%s182 + $0x60] sm:$0xff]
        %v206 = vld [vmem:[%s182 + $0x68] sm:$0xff]
        %v207 = vld [vmem:[%s182 + $0x70] sm:$0xff]
        %v208 = vld [vmem:[%s182 + $0x78] sm:$0xff]
        %v209 = vld [vmem:[%s182 + $0x80] sm:$0xff]
        %v210 = vld [vmem:[%s182 + $0x88] sm:$0xff]
        %v211 = vld [vmem:[%s182 + $0x90] sm:$0xff]
        %v212 = vld [vmem:[%s182 + $0x98] sm:$0xff]
        %v213 = vld [vmem:[%s182 + $0xa0] sm:$0xff]
        %v214 = vld [vmem:[%s182 + $0xa8] sm:$0xff]
        %v215 = vld [vmem:[%s182 + $0xb0] sm:$0xff]
        %v216 = vld [vmem:[%s182 + $0xb8] sm:$0xff]
        %v217 = vld [vmem:[%s182 + $0xc0] sm:$0xff]
        %v218 = vld [vmem:[%s182 + $0xc8] sm:$0xff]
        %v219 = vld [vmem:[%s182 + $0xd0] sm:$0xff]
        %v220 = vld [vmem:[%s182 + $0xd8] sm:$0xff]
        %v221 = vld [vmem:[%s182 + $0xe0] sm:$0xff]
        %v222 = vld [vmem:[%s182 + $0xe8] sm:$0xff]
        %v223 = vld [vmem:[%s182 + $0xf0] sm:$0xff]
        %v224 = vld [vmem:[%s182 + $0xf8] sm:$0xff]
        %v225 = vld [vmem:[%s182 + $0x100] sm:$0xff]
        %v226 = vld [vmem:[%s182 + $0x108] sm:$0xff]
        %v227 = vld [vmem:[%s182 + $0x110] sm:$0xff]
        %v228 = vld [vmem:[%s182 + $0x118] sm:$0xff]
        %v229 = vld [vmem:[%s182 + $0x120] sm:$0xff]
        %v230 = vld [vmem:[%s182 + $0x128] sm:$0xff]
        %v231 = vld [vmem:[%s182 + $0x130] sm:$0xff]
        %v232 = vld [vmem:[%s182 + $0x138] sm:$0xff]
        %v233 = vld [vmem:[%s182 + $0x140] sm:$0xff]
        %v234 = vld [vmem:[%s182 + $0x148] sm:$0xff]
        %v235 = vld [vmem:[%s182 + $0x150] sm:$0xff]
        %v236 = vld [vmem:[%s182 + $0x158] sm:$0xff]
        %v237 = vld [vmem:[%s182 + $0x160] sm:$0xff]
        %v238 = vld [vmem:[%s182 + $0x168] sm:$0xff]
        %v239 = vld [vmem:[%s182 + $0x170] sm:$0xff]
        %v240 = vld [vmem:[%s182 + $0x178] sm:$0xff]
        %v241 = vld [vmem:[%s182 + $0x180] sm:$0xff]
        %v242 = vld [vmem:[%s182 + $0x188] sm:$0xff]
        %v243 = vld [vmem:[%s182 + $0x190] sm:$0xff]
        %v244 = vld [vmem:[%s182 + $0x198] sm:$0xff]
        %v245 = vld [vmem:[%s182 + $0x1a0] sm:$0xff]
        %v246 = vld [vmem:[%s182 + $0x1a8] sm:$0xff]
        %v247 = vld [vmem:[%s182 + $0x1b0] sm:$0xff]
        %v248 = vld [vmem:[%s182 + $0x1b8] sm:$0xff]
        %v249 = vld [vmem:[%s182 + $0x1c0] sm:$0xff]
        %v250 = vld [vmem:[%s182 + $0x1c8] sm:$0xff]
        %v251 = vld [vmem:[%s182 + $0x1d0] sm:$0xff]
        %v252 = vld [vmem:[%s182 + $0x1d8] sm:$0xff]
        %v253 = vld [vmem:[%s182 + $0x1e0] sm:$0xff]
        %v254 = vld [vmem:[%s182 + $0x1e8] sm:$0xff]
        %v255 = vld [vmem:[%s182 + $0x1f0] sm:$0xff]
        %v256 = vld [vmem:[%s182 + $0x1f8] sm:$0xff]
        %v257 = vld [vmem:[%s182 + $0x200] sm:$0xff]
        %v258 = vld [vmem:[%s182 + $0x208] sm:$0xff]
        %v259 = vld [vmem:[%s182 + $0x210] sm:$0xff]
        %v260 = vld [vmem:[%s182 + $0x218] sm:$0xff]
        %v261 = vld [vmem:[%s182 + $0x220] sm:$0xff]
        %v262 = vld [vmem:[%s182 + $0x228] sm:$0xff]
        %v263 = vld [vmem:[%s182 + $0x230] sm:$0xff]
        %v264 = vld [vmem:[%s182 + $0x238] sm:$0xff]
        %v265 = vld [vmem:[%s182 + $0x240] sm:$0xff]
        %v266 = vld [vmem:[%s182 + $0x248] sm:$0xff]
        %v267 = vld [vmem:[%s182 + $0x250] sm:$0xff]
        %v268 = vld [vmem:[%s182 + $0x258] sm:$0xff]
        %v269 = vld [vmem:[%s182 + $0x260] sm:$0xff]
        %v270 = vld [vmem:[%s182 + $0x268] sm:$0xff]
        %v271 = vld [vmem:[%s182 + $0x270] sm:$0xff]
        %v272 = vld [vmem:[%s182 + $0x278] sm:$0xff]
        %v273 = vld [vmem:[%s182 + $0x280] sm:$0xff]
        %v274 = vld [vmem:[%s182 + $0x288] sm:$0xff]
        %v275 = vld [vmem:[%s182 + $0x290] sm:$0xff]
        %v276 = vld [vmem:[%s182 + $0x298] sm:$0xff]
        %v277 = vld [vmem:[%s182 + $0x2a0] sm:$0xff]
        %v278 = vld [vmem:[%s182 + $0x2a8] sm:$0xff]
        %v279 = vld [vmem:[%s182 + $0x2b0] sm:$0xff]
        %v280 = vld [vmem:[%s182 + $0x2b8] sm:$0xff]
        %v281 = vld [vmem:[%s182 + $0x2c0] sm:$0xff]
        %v282 = vld [vmem:[%s182 + $0x2c8] sm:$0xff]
        %v283 = vld [vmem:[%s182 + $0x2d0] sm:$0xff]
        %v284 = vld [vmem:[%s182 + $0x2d8] sm:$0xff]
        %v285 = vld [vmem:[%s182 + $0x2e0] sm:$0xff]
        %v286 = vld [vmem:[%s182 + $0x2e8] sm:$0xff]
        %v287 = vld [vmem:[%s182 + $0x2f0] sm:$0xff]
        %v288 = vld [vmem:[%s182 + $0x2f8] sm:$0xff]
        %v289 = vld [vmem:[%s182 + $0x300] sm:$0xff]
        %v290 = vld [vmem:[%s182 + $0x308] sm:$0xff]
        %v291 = vld [vmem:[%s182 + $0x310] sm:$0xff]
        %v292 = vld [vmem:[%s182 + $0x318] sm:$0xff]
        %v293 = vld [vmem:[%s182 + $0x320] sm:$0xff]
        %v294 = vld [vmem:[%s182 + $0x328] sm:$0xff]
        %v295 = vld [vmem:[%s182 + $0x330] sm:$0xff]
        %v296 = vld [vmem:[%s182 + $0x338] sm:$0xff]
        %v297 = vld [vmem:[%s182 + $0x340] sm:$0xff]
        %v298 = vld [vmem:[%s182 + $0x348] sm:$0xff]
        %v299 = vld [vmem:[%s182 + $0x350] sm:$0xff]
        %v300 = vld [vmem:[%s182 + $0x358] sm:$0xff]
        %v301 = vld [vmem:[%s182 + $0x360] sm:$0xff]
        %v302 = vld [vmem:[%s182 + $0x368] sm:$0xff]
        %v303 = vld [vmem:[%s182 + $0x370] sm:$0xff]
        %v304 = vld [vmem:[%s182 + $0x378] sm:$0xff]
        %v305 = vld [vmem:[%s1] sm:$0x1]
        %v307 = vlaneseq
        %v308 = vshrl.u32 %v307, 7
        %v309 = vsub.s32 0, %v308
        %v310 = vrot.slane %v305, %v309
        %v312 = vmul.f32 %v193, %v310
        %v313 = vmul.f32 %v194, %v310
        %v314 = vmul.f32 %v195, %v310
        %v315 = vmul.f32 %v196, %v310
        %v316 = vmul.f32 %v197, %v310
        %v317 = vmul.f32 %v198, %v310
        %v318 = vmul.f32 %v199, %v310
        %v319 = vmul.f32 %v200, %v310
        %v320 = vmul.f32 %v201, %v310
        %v321 = vmul.f32 %v202, %v310
        %v322 = vmul.f32 %v203, %v310
        %v323 = vmul.f32 %v204, %v310
        %v324 = vmul.f32 %v205, %v310
        %v325 = vmul.f32 %v206, %v310
        %v326 = vmul.f32 %v207, %v310
        %v327 = vmul.f32 %v208, %v310
        %v328 = vmul.f32 %v209, %v310
        %v329 = vmul.f32 %v210, %v310
        %v330 = vmul.f32 %v211, %v310
        %v331 = vmul.f32 %v212, %v310
        %v332 = vmul.f32 %v213, %v310
        %v333 = vmul.f32 %v214, %v310
        %v334 = vmul.f32 %v215, %v310
        %v335 = vmul.f32 %v216, %v310
        %v336 = vmul.f32 %v217, %v310
        %v337 = vmul.f32 %v218, %v310
        %v338 = vmul.f32 %v219, %v310
        %v339 = vmul.f32 %v220, %v310
        %v340 = vmul.f32 %v221, %v310
        %v341 = vmul.f32 %v222, %v310
        %v342 = vmul.f32 %v223, %v310
        %v343 = vmul.f32 %v224, %v310
        %v344 = vmul.f32 %v225, %v310
        %v345 = vmul.f32 %v226, %v310
        %v346 = vmul.f32 %v227, %v310
        %v347 = vmul.f32 %v228, %v310
        %v348 = vmul.f32 %v229, %v310
        %v349 = vmul.f32 %v230, %v310
        %v350 = vmul.f32 %v231, %v310
        %v351 = vmul.f32 %v232, %v310
        %v352 = vmul.f32 %v233, %v310
        %v353 = vmul.f32 %v234, %v310
        %v354 = vmul.f32 %v235, %v310
        %v355 = vmul.f32 %v236, %v310
        %v356 = vmul.f32 %v237, %v310
        %v357 = vmul.f32 %v238, %v310
        %v358 = vmul.f32 %v239, %v310
        %v359 = vmul.f32 %v240, %v310
        %v360 = vmul.f32 %v241, %v310
        %v361 = vmul.f32 %v242, %v310
        %v362 = vmul.f32 %v243, %v310
        %v363 = vmul.f32 %v244, %v310
        %v364 = vmul.f32 %v245, %v310
        %v365 = vmul.f32 %v246, %v310
        %v366 = vmul.f32 %v247, %v310
        %v367 = vmul.f32 %v248, %v310
        %v368 = vmul.f32 %v249, %v310
        %v369 = vmul.f32 %v250, %v310
        %v370 = vmul.f32 %v251, %v310
        %v371 = vmul.f32 %v252, %v310
        %v372 = vmul.f32 %v253, %v310
        %v373 = vmul.f32 %v254, %v310
        %v374 = vmul.f32 %v255, %v310
        %v375 = vmul.f32 %v256, %v310
        %v376 = vmul.f32 %v257, %v310
        %v377 = vmul.f32 %v258, %v310
        %v378 = vmul.f32 %v259, %v310
        %v379 = vmul.f32 %v260, %v310
        %v380 = vmul.f32 %v261, %v310
        %v381 = vmul.f32 %v262, %v310
        %v382 = vmul.f32 %v263, %v310
        %v383 = vmul.f32 %v264, %v310
        %v384 = vmul.f32 %v265, %v310
        %v385 = vmul.f32 %v266, %v310
        %v386 = vmul.f32 %v267, %v310
        %v387 = vmul.f32 %v268, %v310
        %v388 = vmul.f32 %v269, %v310
        %v389 = vmul.f32 %v270, %v310
        %v390 = vmul.f32 %v271, %v310
        %v391 = vmul.f32 %v272, %v310
        %v392 = vmul.f32 %v273, %v310
        %v393 = vmul.f32 %v274, %v310
        %v394 = vmul.f32 %v275, %v310
        %v395 = vmul.f32 %v276, %v310
        %v396 = vmul.f32 %v277, %v310
        %v397 = vmul.f32 %v278, %v310
        %v398 = vmul.f32 %v279, %v310
        %v399 = vmul.f32 %v280, %v310
        %v400 = vmul.f32 %v281, %v310
        %v401 = vmul.f32 %v282, %v310
        %v402 = vmul.f32 %v283, %v310
        %v403 = vmul.f32 %v284, %v310
        %v404 = vmul.f32 %v285, %v310
        %v405 = vmul.f32 %v286, %v310
        %v406 = vmul.f32 %v287, %v310
        %v407 = vmul.f32 %v288, %v310
        %v408 = vmul.f32 %v289, %v310
        %v409 = vmul.f32 %v290, %v310
        %v410 = vmul.f32 %v291, %v310
        %v411 = vmul.f32 %v292, %v310
        %v412 = vmul.f32 %v293, %v310
        %v413 = vmul.f32 %v294, %v310
        %v414 = vmul.f32 %v295, %v310
        %v415 = vmul.f32 %v296, %v310
        %v416 = vmul.f32 %v297, %v310
        %v417 = vmul.f32 %v298, %v310
        %v418 = vmul.f32 %v299, %v310
        %v419 = vmul.f32 %v300, %v310
        %v420 = vmul.f32 %v301, %v310
        %v421 = vmul.f32 %v302, %v310
        %v422 = vmul.f32 %v303, %v310
        %v423 = vmul.f32 %v304, %v310
        %vm424 = vcmask 261120
        %v425 = vsel %vm424, %v312, 0.0
        %426 = vadd.xlane.f32.xlu0 %v425
        %v427 = vpop.xlane.xlu0 %426
        %v428 = vsel %vm424, %v313, 0.0
        %429 = vadd.xlane.f32.xlu0 %v428
        %v430 = vpop.xlane.xlu0 %429
        %v431 = vsel %vm424, %v314, 0.0
        %432 = vadd.xlane.f32.xlu0 %v431
        %v433 = vpop.xlane.xlu0 %432
        %v434 = vsel %vm424, %v315, 0.0
        %435 = vadd.xlane.f32.xlu0 %v434
        %v436 = vpop.xlane.xlu0 %435
        %v437 = vsel %vm424, %v316, 0.0
        %438 = vadd.xlane.f32.xlu0 %v437
        %v439 = vpop.xlane.xlu0 %438
        %v440 = vsel %vm424, %v317, 0.0
        %441 = vadd.xlane.f32.xlu0 %v440
        %v442 = vpop.xlane.xlu0 %441
        %v443 = vsel %vm424, %v318, 0.0
        %444 = vadd.xlane.f32.xlu0 %v443
        %v445 = vpop.xlane.xlu0 %444
        %v446 = vsel %vm424, %v319, 0.0
        %447 = vadd.xlane.f32.xlu0 %v446
        %v448 = vpop.xlane.xlu0 %447
        %v449 = vsel %vm424, %v320, 0.0
        %450 = vadd.xlane.f32.xlu0 %v449
        %v451 = vpop.xlane.xlu0 %450
        %v452 = vsel %vm424, %v321, 0.0
        %453 = vadd.xlane.f32.xlu0 %v452
        %v454 = vpop.xlane.xlu0 %453
        %v455 = vsel %vm424, %v322, 0.0
        %456 = vadd.xlane.f32.xlu0 %v455
        %v457 = vpop.xlane.xlu0 %456
        %v458 = vsel %vm424, %v323, 0.0
        %459 = vadd.xlane.f32.xlu0 %v458
        %v460 = vpop.xlane.xlu0 %459
        %v461 = vsel %vm424, %v324, 0.0
        %462 = vadd.xlane.f32.xlu0 %v461
        %v463 = vpop.xlane.xlu0 %462
        %v464 = vsel %vm424, %v325, 0.0
        %465 = vadd.xlane.f32.xlu0 %v464
        %v466 = vpop.xlane.xlu0 %465
        %v467 = vsel %vm424, %v326, 0.0
        %468 = vadd.xlane.f32.xlu0 %v467
        %v469 = vpop.xlane.xlu0 %468
        %v470 = vsel %vm424, %v327, 0.0
        %471 = vadd.xlane.f32.xlu0 %v470
        %v472 = vpop.xlane.xlu0 %471
        %v473 = vsel %vm424, %v328, 0.0
        %474 = vadd.xlane.f32.xlu0 %v473
        %v475 = vpop.xlane.xlu0 %474
        %v476 = vsel %vm424, %v329, 0.0
        %477 = vadd.xlane.f32.xlu0 %v476
        %v478 = vpop.xlane.xlu0 %477
        %v479 = vsel %vm424, %v330, 0.0
        %480 = vadd.xlane.f32.xlu0 %v479
        %v481 = vpop.xlane.xlu0 %480
        %v482 = vsel %vm424, %v331, 0.0
        %483 = vadd.xlane.f32.xlu0 %v482
        %v484 = vpop.xlane.xlu0 %483
        %v485 = vsel %vm424, %v332, 0.0
        %486 = vadd.xlane.f32.xlu0 %v485
        %v487 = vpop.xlane.xlu0 %486
        %v488 = vsel %vm424, %v333, 0.0
        %489 = vadd.xlane.f32.xlu0 %v488
        %v490 = vpop.xlane.xlu0 %489
        %v491 = vsel %vm424, %v334, 0.0
        %492 = vadd.xlane.f32.xlu0 %v491
        %v493 = vpop.xlane.xlu0 %492
        %v494 = vsel %vm424, %v335, 0.0
        %495 = vadd.xlane.f32.xlu0 %v494
        %v496 = vpop.xlane.xlu0 %495
        %v497 = vsel %vm424, %v336, 0.0
        %498 = vadd.xlane.f32.xlu0 %v497
        %v499 = vpop.xlane.xlu0 %498
        %v500 = vsel %vm424, %v337, 0.0
        %501 = vadd.xlane.f32.xlu0 %v500
        %v502 = vpop.xlane.xlu0 %501
        %v503 = vsel %vm424, %v338, 0.0
        %504 = vadd.xlane.f32.xlu0 %v503
        %v505 = vpop.xlane.xlu0 %504
        %v506 = vsel %vm424, %v339, 0.0
        %507 = vadd.xlane.f32.xlu0 %v506
        %v508 = vpop.xlane.xlu0 %507
        %v509 = vsel %vm424, %v340, 0.0
        %510 = vadd.xlane.f32.xlu0 %v509
        %v511 = vpop.xlane.xlu0 %510
        %v512 = vsel %vm424, %v341, 0.0
        %513 = vadd.xlane.f32.xlu0 %v512
        %v514 = vpop.xlane.xlu0 %513
        %v515 = vsel %vm424, %v342, 0.0
        %516 = vadd.xlane.f32.xlu0 %v515
        %v517 = vpop.xlane.xlu0 %516
        %v518 = vsel %vm424, %v343, 0.0
        %519 = vadd.xlane.f32.xlu0 %v518
        %v520 = vpop.xlane.xlu0 %519
        %v521 = vsel %vm424, %v344, 0.0
        %522 = vadd.xlane.f32.xlu0 %v521
        %v523 = vpop.xlane.xlu0 %522
        %v524 = vsel %vm424, %v345, 0.0
        %525 = vadd.xlane.f32.xlu0 %v524
        %v526 = vpop.xlane.xlu0 %525
        %v527 = vsel %vm424, %v346, 0.0
        %528 = vadd.xlane.f32.xlu0 %v527
        %v529 = vpop.xlane.xlu0 %528
        %v530 = vsel %vm424, %v347, 0.0
        %531 = vadd.xlane.f32.xlu0 %v530
        %v532 = vpop.xlane.xlu0 %531
        %v533 = vsel %vm424, %v348, 0.0
        %534 = vadd.xlane.f32.xlu0 %v533
        %v535 = vpop.xlane.xlu0 %534
        %v536 = vsel %vm424, %v349, 0.0
        %537 = vadd.xlane.f32.xlu0 %v536
        %v538 = vpop.xlane.xlu0 %537
        %v539 = vsel %vm424, %v350, 0.0
        %540 = vadd.xlane.f32.xlu0 %v539
        %v541 = vpop.xlane.xlu0 %540
        %v542 = vsel %vm424, %v351, 0.0
        %543 = vadd.xlane.f32.xlu0 %v542
        %v544 = vpop.xlane.xlu0 %543
        %v545 = vsel %vm424, %v352, 0.0
        %546 = vadd.xlane.f32.xlu0 %v545
        %v547 = vpop.xlane.xlu0 %546
        %v548 = vsel %vm424, %v353, 0.0
        %549 = vadd.xlane.f32.xlu0 %v548
        %v550 = vpop.xlane.xlu0 %549
        %v551 = vsel %vm424, %v354, 0.0
        %552 = vadd.xlane.f32.xlu0 %v551
        %v553 = vpop.xlane.xlu0 %552
        %v554 = vsel %vm424, %v355, 0.0
        %555 = vadd.xlane.f32.xlu0 %v554
        %v556 = vpop.xlane.xlu0 %555
        %v557 = vsel %vm424, %v356, 0.0
        %558 = vadd.xlane.f32.xlu0 %v557
        %v559 = vpop.xlane.xlu0 %558
        %v560 = vsel %vm424, %v357, 0.0
        %561 = vadd.xlane.f32.xlu0 %v560
        %v562 = vpop.xlane.xlu0 %561
        %v563 = vsel %vm424, %v358, 0.0
        %564 = vadd.xlane.f32.xlu0 %v563
        %v565 = vpop.xlane.xlu0 %564
        %v566 = vsel %vm424, %v359, 0.0
        %567 = vadd.xlane.f32.xlu0 %v566
        %v568 = vpop.xlane.xlu0 %567
        %v569 = vsel %vm424, %v360, 0.0
        %570 = vadd.xlane.f32.xlu0 %v569
        %v571 = vpop.xlane.xlu0 %570
        %v572 = vsel %vm424, %v361, 0.0
        %573 = vadd.xlane.f32.xlu0 %v572
        %v574 = vpop.xlane.xlu0 %573
        %v575 = vsel %vm424, %v362, 0.0
        %576 = vadd.xlane.f32.xlu0 %v575
        %v577 = vpop.xlane.xlu0 %576
        %v578 = vsel %vm424, %v363, 0.0
        %579 = vadd.xlane.f32.xlu0 %v578
        %v580 = vpop.xlane.xlu0 %579
        %v581 = vsel %vm424, %v364, 0.0
        %582 = vadd.xlane.f32.xlu0 %v581
        %v583 = vpop.xlane.xlu0 %582
        %v584 = vsel %vm424, %v365, 0.0
        %585 = vadd.xlane.f32.xlu0 %v584
        %v586 = vpop.xlane.xlu0 %585
        %v587 = vsel %vm424, %v366, 0.0
        %588 = vadd.xlane.f32.xlu0 %v587
        %v589 = vpop.xlane.xlu0 %588
        %v590 = vsel %vm424, %v367, 0.0
        %591 = vadd.xlane.f32.xlu0 %v590
        %v592 = vpop.xlane.xlu0 %591
        %v593 = vsel %vm424, %v368, 0.0
        %594 = vadd.xlane.f32.xlu0 %v593
        %v595 = vpop.xlane.xlu0 %594
        %v596 = vsel %vm424, %v369, 0.0
        %597 = vadd.xlane.f32.xlu0 %v596
        %v598 = vpop.xlane.xlu0 %597
        %v599 = vsel %vm424, %v370, 0.0
        %600 = vadd.xlane.f32.xlu0 %v599
        %v601 = vpop.xlane.xlu0 %600
        %v602 = vsel %vm424, %v371, 0.0
        %603 = vadd.xlane.f32.xlu0 %v602
        %v604 = vpop.xlane.xlu0 %603
        %v605 = vsel %vm424, %v372, 0.0
        %606 = vadd.xlane.f32.xlu0 %v605
        %v607 = vpop.xlane.xlu0 %606
        %v608 = vsel %vm424, %v373, 0.0
        %609 = vadd.xlane.f32.xlu0 %v608
        %v610 = vpop.xlane.xlu0 %609
        %v611 = vsel %vm424, %v374, 0.0
        %612 = vadd.xlane.f32.xlu0 %v611
        %v613 = vpop.xlane.xlu0 %612
        %v614 = vsel %vm424, %v375, 0.0
        %615 = vadd.xlane.f32.xlu0 %v614
        %v616 = vpop.xlane.xlu0 %615
        %v617 = vsel %vm424, %v376, 0.0
        %618 = vadd.xlane.f32.xlu0 %v617
        %v619 = vpop.xlane.xlu0 %618
        %v620 = vsel %vm424, %v377, 0.0
        %621 = vadd.xlane.f32.xlu0 %v620
        %v622 = vpop.xlane.xlu0 %621
        %v623 = vsel %vm424, %v378, 0.0
        %624 = vadd.xlane.f32.xlu0 %v623
        %v625 = vpop.xlane.xlu0 %624
        %v626 = vsel %vm424, %v379, 0.0
        %627 = vadd.xlane.f32.xlu0 %v626
        %v628 = vpop.xlane.xlu0 %627
        %v629 = vsel %vm424, %v380, 0.0
        %630 = vadd.xlane.f32.xlu0 %v629
        %v631 = vpop.xlane.xlu0 %630
        %v632 = vsel %vm424, %v381, 0.0
        %633 = vadd.xlane.f32.xlu0 %v632
        %v634 = vpop.xlane.xlu0 %633
        %v635 = vsel %vm424, %v382, 0.0
        %636 = vadd.xlane.f32.xlu0 %v635
        %v637 = vpop.xlane.xlu0 %636
        %v638 = vsel %vm424, %v383, 0.0
        %639 = vadd.xlane.f32.xlu0 %v638
        %v640 = vpop.xlane.xlu0 %639
        %v641 = vsel %vm424, %v384, 0.0
        %642 = vadd.xlane.f32.xlu0 %v641
        %v643 = vpop.xlane.xlu0 %642
        %v644 = vsel %vm424, %v385, 0.0
        %645 = vadd.xlane.f32.xlu0 %v644
        %v646 = vpop.xlane.xlu0 %645
        %v647 = vsel %vm424, %v386, 0.0
        %648 = vadd.xlane.f32.xlu0 %v647
        %v649 = vpop.xlane.xlu0 %648
        %v650 = vsel %vm424, %v387, 0.0
        %651 = vadd.xlane.f32.xlu0 %v650
        %v652 = vpop.xlane.xlu0 %651
        %v653 = vsel %vm424, %v388, 0.0
        %654 = vadd.xlane.f32.xlu0 %v653
        %v655 = vpop.xlane.xlu0 %654
        %v656 = vsel %vm424, %v389, 0.0
        %657 = vadd.xlane.f32.xlu0 %v656
        %v658 = vpop.xlane.xlu0 %657
        %v659 = vsel %vm424, %v390, 0.0
        %660 = vadd.xlane.f32.xlu0 %v659
        %v661 = vpop.xlane.xlu0 %660
        %v662 = vsel %vm424, %v391, 0.0
        %663 = vadd.xlane.f32.xlu0 %v662
        %v664 = vpop.xlane.xlu0 %663
        %v665 = vsel %vm424, %v392, 0.0
        %666 = vadd.xlane.f32.xlu0 %v665
        %v667 = vpop.xlane.xlu0 %666
        %v668 = vsel %vm424, %v393, 0.0
        %669 = vadd.xlane.f32.xlu0 %v668
        %v670 = vpop.xlane.xlu0 %669
        %v671 = vsel %vm424, %v394, 0.0
        %672 = vadd.xlane.f32.xlu0 %v671
        %v673 = vpop.xlane.xlu0 %672
        %v674 = vsel %vm424, %v395, 0.0
        %675 = vadd.xlane.f32.xlu0 %v674
        %v676 = vpop.xlane.xlu0 %675
        %v677 = vsel %vm424, %v396, 0.0
        %678 = vadd.xlane.f32.xlu0 %v677
        %v679 = vpop.xlane.xlu0 %678
        %v680 = vsel %vm424, %v397, 0.0
        %681 = vadd.xlane.f32.xlu0 %v680
        %v682 = vpop.xlane.xlu0 %681
        %v683 = vsel %vm424, %v398, 0.0
        %684 = vadd.xlane.f32.xlu0 %v683
        %v685 = vpop.xlane.xlu0 %684
        %v686 = vsel %vm424, %v399, 0.0
        %687 = vadd.xlane.f32.xlu0 %v686
        %v688 = vpop.xlane.xlu0 %687
        %v689 = vsel %vm424, %v400, 0.0
        %690 = vadd.xlane.f32.xlu0 %v689
        %v691 = vpop.xlane.xlu0 %690
        %v692 = vsel %vm424, %v401, 0.0
        %693 = vadd.xlane.f32.xlu0 %v692
        %v694 = vpop.xlane.xlu0 %693
        %v695 = vsel %vm424, %v402, 0.0
        %696 = vadd.xlane.f32.xlu0 %v695
        %v697 = vpop.xlane.xlu0 %696
        %v698 = vsel %vm424, %v403, 0.0
        %699 = vadd.xlane.f32.xlu0 %v698
        %v700 = vpop.xlane.xlu0 %699
        %v701 = vsel %vm424, %v404, 0.0
        %702 = vadd.xlane.f32.xlu0 %v701
        %v703 = vpop.xlane.xlu0 %702
        %v704 = vsel %vm424, %v405, 0.0
        %705 = vadd.xlane.f32.xlu0 %v704
        %v706 = vpop.xlane.xlu0 %705
        %v707 = vsel %vm424, %v406, 0.0
        %708 = vadd.xlane.f32.xlu0 %v707
        %v709 = vpop.xlane.xlu0 %708
        %v710 = vsel %vm424, %v407, 0.0
        %711 = vadd.xlane.f32.xlu0 %v710
        %v712 = vpop.xlane.xlu0 %711
        %v713 = vsel %vm424, %v408, 0.0
        %714 = vadd.xlane.f32.xlu0 %v713
        %v715 = vpop.xlane.xlu0 %714
        %v716 = vsel %vm424, %v409, 0.0
        %717 = vadd.xlane.f32.xlu0 %v716
        %v718 = vpop.xlane.xlu0 %717
        %v719 = vsel %vm424, %v410, 0.0
        %720 = vadd.xlane.f32.xlu0 %v719
        %v721 = vpop.xlane.xlu0 %720
        %v722 = vsel %vm424, %v411, 0.0
        %723 = vadd.xlane.f32.xlu0 %v722
        %v724 = vpop.xlane.xlu0 %723
        %v725 = vsel %vm424, %v412, 0.0
        %726 = vadd.xlane.f32.xlu0 %v725
        %v727 = vpop.xlane.xlu0 %726
        %v728 = vsel %vm424, %v413, 0.0
        %729 = vadd.xlane.f32.xlu0 %v728
        %v730 = vpop.xlane.xlu0 %729
        %v731 = vsel %vm424, %v414, 0.0
        %732 = vadd.xlane.f32.xlu0 %v731
        %v733 = vpop.xlane.xlu0 %732
        %v734 = vsel %vm424, %v415, 0.0
        %735 = vadd.xlane.f32.xlu0 %v734
        %v736 = vpop.xlane.xlu0 %735
        %v737 = vsel %vm424, %v416, 0.0
        %738 = vadd.xlane.f32.xlu0 %v737
        %v739 = vpop.xlane.xlu0 %738
        %v740 = vsel %vm424, %v417, 0.0
        %741 = vadd.xlane.f32.xlu0 %v740
        %v742 = vpop.xlane.xlu0 %741
        %v743 = vsel %vm424, %v418, 0.0
        %744 = vadd.xlane.f32.xlu0 %v743
        %v745 = vpop.xlane.xlu0 %744
        %v746 = vsel %vm424, %v419, 0.0
        %747 = vadd.xlane.f32.xlu0 %v746
        %v748 = vpop.xlane.xlu0 %747
        %v749 = vsel %vm424, %v420, 0.0
        %750 = vadd.xlane.f32.xlu0 %v749
        %v751 = vpop.xlane.xlu0 %750
        %v752 = vsel %vm424, %v421, 0.0
        %753 = vadd.xlane.f32.xlu0 %v752
        %v754 = vpop.xlane.xlu0 %753
        %v755 = vsel %vm424, %v422, 0.0
        %756 = vadd.xlane.f32.xlu0 %v755
        %v757 = vpop.xlane.xlu0 %756
        %v758 = vsel %vm424, %v423, 0.0
        %759 = vadd.xlane.f32.xlu0 %v758
        %v760 = vpop.xlane.xlu0 %759
        %s761 = sld [smem:[#allocation2]]
        %v762 = vstv %s761
        %v763 = vadd.f32 %v427, %v762
        %v764 = vadd.f32 %v430, %v762
        %v765 = vadd.f32 %v433, %v762
        %v766 = vadd.f32 %v436, %v762
        %v767 = vadd.f32 %v439, %v762
        %v768 = vadd.f32 %v442, %v762
        %v769 = vadd.f32 %v445, %v762
        %v770 = vadd.f32 %v448, %v762
        %v771 = vadd.f32 %v451, %v762
        %v772 = vadd.f32 %v454, %v762
        %v773 = vadd.f32 %v457, %v762
        %v774 = vadd.f32 %v460, %v762
        %v775 = vadd.f32 %v463, %v762
        %v776 = vadd.f32 %v466, %v762
        %v777 = vadd.f32 %v469, %v762
        %v778 = vadd.f32 %v472, %v762
        %v779 = vadd.f32 %v475, %v762
        %v780 = vadd.f32 %v478, %v762
        %v781 = vadd.f32 %v481, %v762
        %v782 = vadd.f32 %v484, %v762
        %v783 = vadd.f32 %v487, %v762
        %v784 = vadd.f32 %v490, %v762
        %v785 = vadd.f32 %v493, %v762
        %v786 = vadd.f32 %v496, %v762
        %v787 = vadd.f32 %v499, %v762
        %v788 = vadd.f32 %v502, %v762
        %v789 = vadd.f32 %v505, %v762
        %v790 = vadd.f32 %v508, %v762
        %v791 = vadd.f32 %v511, %v762
        %v792 = vadd.f32 %v514, %v762
        %v793 = vadd.f32 %v517, %v762
        %v794 = vadd.f32 %v520, %v762
        %v795 = vadd.f32 %v523, %v762
        %v796 = vadd.f32 %v526, %v762
        %v797 = vadd.f32 %v529, %v762
        %v798 = vadd.f32 %v532, %v762
        %v799 = vadd.f32 %v535, %v762
        %v800 = vadd.f32 %v538, %v762
        %v801 = vadd.f32 %v541, %v762
        %v802 = vadd.f32 %v544, %v762
        %v803 = vadd.f32 %v547, %v762
        %v804 = vadd.f32 %v550, %v762
        %v805 = vadd.f32 %v553, %v762
        %v806 = vadd.f32 %v556, %v762
        %v807 = vadd.f32 %v559, %v762
        %v808 = vadd.f32 %v562, %v762
        %v809 = vadd.f32 %v565, %v762
        %v810 = vadd.f32 %v568, %v762
        %v811 = vadd.f32 %v571, %v762
        %v812 = vadd.f32 %v574, %v762
        %v813 = vadd.f32 %v577, %v762
        %v814 = vadd.f32 %v580, %v762
        %v815 = vadd.f32 %v583, %v762
        %v816 = vadd.f32 %v586, %v762
        %v817 = vadd.f32 %v589, %v762
        %v818 = vadd.f32 %v592, %v762
        %v819 = vadd.f32 %v595, %v762
        %v820 = vadd.f32 %v598, %v762
        %v821 = vadd.f32 %v601, %v762
        %v822 = vadd.f32 %v604, %v762
        %v823 = vadd.f32 %v607, %v762
        %v824 = vadd.f32 %v610, %v762
        %v825 = vadd.f32 %v613, %v762
        %v826 = vadd.f32 %v616, %v762
        %v827 = vadd.f32 %v619, %v762
        %v828 = vadd.f32 %v622, %v762
        %v829 = vadd.f32 %v625, %v762
        %v830 = vadd.f32 %v628, %v762
        %v831 = vadd.f32 %v631, %v762
        %v832 = vadd.f32 %v634, %v762
        %v833 = vadd.f32 %v637, %v762
        %v834 = vadd.f32 %v640, %v762
        %v835 = vadd.f32 %v643, %v762
        %v836 = vadd.f32 %v646, %v762
        %v837 = vadd.f32 %v649, %v762
        %v838 = vadd.f32 %v652, %v762
        %v839 = vadd.f32 %v655, %v762
        %v840 = vadd.f32 %v658, %v762
        %v841 = vadd.f32 %v661, %v762
        %v842 = vadd.f32 %v664, %v762
        %v843 = vadd.f32 %v667, %v762
        %v844 = vadd.f32 %v670, %v762
        %v845 = vadd.f32 %v673, %v762
        %v846 = vadd.f32 %v676, %v762
        %v847 = vadd.f32 %v679, %v762
        %v848 = vadd.f32 %v682, %v762
        %v849 = vadd.f32 %v685, %v762
        %v850 = vadd.f32 %v688, %v762
        %v851 = vadd.f32 %v691, %v762
        %v852 = vadd.f32 %v694, %v762
        %v853 = vadd.f32 %v697, %v762
        %v854 = vadd.f32 %v700, %v762
        %v855 = vadd.f32 %v703, %v762
        %v856 = vadd.f32 %v706, %v762
        %v857 = vadd.f32 %v709, %v762
        %v858 = vadd.f32 %v712, %v762
        %v859 = vadd.f32 %v715, %v762
        %v860 = vadd.f32 %v718, %v762
        %v861 = vadd.f32 %v721, %v762
        %v862 = vadd.f32 %v724, %v762
        %v863 = vadd.f32 %v727, %v762
        %v864 = vadd.f32 %v730, %v762
        %v865 = vadd.f32 %v733, %v762
        %v866 = vadd.f32 %v736, %v762
        %v867 = vadd.f32 %v739, %v762
        %v868 = vadd.f32 %v742, %v762
        %v869 = vadd.f32 %v745, %v762
        %v870 = vadd.f32 %v748, %v762
        %v871 = vadd.f32 %v751, %v762
        %v872 = vadd.f32 %v754, %v762
        %v873 = vadd.f32 %v757, %v762
        %v874 = vadd.f32 %v760, %v762
        %v875 = vxor.u32 %v763, 2147483648
        %v876 = vxor.u32 %v764, 2147483648
        %v877 = vxor.u32 %v765, 2147483648
        %v878 = vxor.u32 %v766, 2147483648
        %v879 = vxor.u32 %v767, 2147483648
        %v880 = vxor.u32 %v768, 2147483648
        %v881 = vxor.u32 %v769, 2147483648
        %v882 = vxor.u32 %v770, 2147483648
        %v883 = vxor.u32 %v771, 2147483648
        %v884 = vxor.u32 %v772, 2147483648
        %v885 = vxor.u32 %v773, 2147483648
        %v886 = vxor.u32 %v774, 2147483648
        %v887 = vxor.u32 %v775, 2147483648
        %v888 = vxor.u32 %v776, 2147483648
        %v889 = vxor.u32 %v777, 2147483648
        %v890 = vxor.u32 %v778, 2147483648
        %v891 = vxor.u32 %v779, 2147483648
        %v892 = vxor.u32 %v780, 2147483648
        %v893 = vxor.u32 %v781, 2147483648
        %v894 = vxor.u32 %v782, 2147483648
        %v895 = vxor.u32 %v783, 2147483648
        %v896 = vxor.u32 %v784, 2147483648
        %v897 = vxor.u32 %v785, 2147483648
        %v898 = vxor.u32 %v786, 2147483648
        %v899 = vxor.u32 %v787, 2147483648
        %v900 = vxor.u32 %v788, 2147483648
        %v901 = vxor.u32 %v789, 2147483648
        %v902 = vxor.u32 %v790, 2147483648
        %v903 = vxor.u32 %v791, 2147483648
        %v904 = vxor.u32 %v792, 2147483648
        %v905 = vxor.u32 %v793, 2147483648
        %v906 = vxor.u32 %v794, 2147483648
        %v907 = vxor.u32 %v795, 2147483648
        %v908 = vxor.u32 %v796, 2147483648
        %v909 = vxor.u32 %v797, 2147483648
        %v910 = vxor.u32 %v798, 2147483648
        %v911 = vxor.u32 %v799, 2147483648
        %v912 = vxor.u32 %v800, 2147483648
        %v913 = vxor.u32 %v801, 2147483648
        %v914 = vxor.u32 %v802, 2147483648
        %v915 = vxor.u32 %v803, 2147483648
        %v916 = vxor.u32 %v804, 2147483648
        %v917 = vxor.u32 %v805, 2147483648
        %v918 = vxor.u32 %v806, 2147483648
        %v919 = vxor.u32 %v807, 2147483648
        %v920 = vxor.u32 %v808, 2147483648
        %v921 = vxor.u32 %v809, 2147483648
        %v922 = vxor.u32 %v810, 2147483648
        %v923 = vxor.u32 %v811, 2147483648
        %v924 = vxor.u32 %v812, 2147483648
        %v925 = vxor.u32 %v813, 2147483648
        %v926 = vxor.u32 %v814, 2147483648
        %v927 = vxor.u32 %v815, 2147483648
        %v928 = vxor.u32 %v816, 2147483648
        %v929 = vxor.u32 %v817, 2147483648
        %v930 = vxor.u32 %v818, 2147483648
        %v931 = vxor.u32 %v819, 2147483648
        %v932 = vxor.u32 %v820, 2147483648
        %v933 = vxor.u32 %v821, 2147483648
        %v934 = vxor.u32 %v822, 2147483648
        %v935 = vxor.u32 %v823, 2147483648
        %v936 = vxor.u32 %v824, 2147483648
        %v937 = vxor.u32 %v825, 2147483648
        %v938 = vxor.u32 %v826, 2147483648
        %v939 = vxor.u32 %v827, 2147483648
        %v940 = vxor.u32 %v828, 2147483648
        %v941 = vxor.u32 %v829, 2147483648
        %v942 = vxor.u32 %v830, 2147483648
        %v943 = vxor.u32 %v831, 2147483648
        %v944 = vxor.u32 %v832, 2147483648
        %v945 = vxor.u32 %v833, 2147483648
        %v946 = vxor.u32 %v834, 2147483648
        %v947 = vxor.u32 %v835, 2147483648
        %v948 = vxor.u32 %v836, 2147483648
        %v949 = vxor.u32 %v837, 2147483648
        %v950 = vxor.u32 %v838, 2147483648
        %v951 = vxor.u32 %v839, 2147483648
        %v952 = vxor.u32 %v840, 2147483648
        %v953 = vxor.u32 %v841, 2147483648
        %v954 = vxor.u32 %v842, 2147483648
        %v955 = vxor.u32 %v843, 2147483648
        %v956 = vxor.u32 %v844, 2147483648
        %v957 = vxor.u32 %v845, 2147483648
        %v958 = vxor.u32 %v846, 2147483648
        %v959 = vxor.u32 %v847, 2147483648
        %v960 = vxor.u32 %v848, 2147483648
        %v961 = vxor.u32 %v849, 2147483648
        %v962 = vxor.u32 %v850, 2147483648
        %v963 = vxor.u32 %v851, 2147483648
        %v964 = vxor.u32 %v852, 2147483648
        %v965 = vxor.u32 %v853, 2147483648
        %v966 = vxor.u32 %v854, 2147483648
        %v967 = vxor.u32 %v855, 2147483648
        %v968 = vxor.u32 %v856, 2147483648
        %v969 = vxor.u32 %v857, 2147483648
        %v970 = vxor.u32 %v858, 2147483648
        %v971 = vxor.u32 %v859, 2147483648
        %v972 = vxor.u32 %v860, 2147483648
        %v973 = vxor.u32 %v861, 2147483648
        %v974 = vxor.u32 %v862, 2147483648
        %v975 = vxor.u32 %v863, 2147483648
        %v976 = vxor.u32 %v864, 2147483648
        %v977 = vxor.u32 %v865, 2147483648
        %v978 = vxor.u32 %v866, 2147483648
        %v979 = vxor.u32 %v867, 2147483648
        %v980 = vxor.u32 %v868, 2147483648
        %v981 = vxor.u32 %v869, 2147483648
        %v982 = vxor.u32 %v870, 2147483648
        %v983 = vxor.u32 %v871, 2147483648
        %v984 = vxor.u32 %v872, 2147483648
        %v985 = vxor.u32 %v873, 2147483648
        %v986 = vxor.u32 %v874, 2147483648
        %v987 = vmul.f32 %v875, 1.442695
        %v988 = vpow.pop %v987
        %v989 = vmul.f32 %v876, 1.442695
        %v990 = vpow.pop %v989
        %v991 = vmul.f32 %v877, 1.442695
        %v992 = vpow.pop %v991
        %v993 = vmul.f32 %v878, 1.442695
        %v994 = vpow.pop %v993
        %v995 = vmul.f32 %v879, 1.442695
        %v996 = vpow.pop %v995
        %v997 = vmul.f32 %v880, 1.442695
        %v998 = vpow.pop %v997
        %v999 = vmul.f32 %v881, 1.442695
        %v1000 = vpow.pop %v999
        %v1001 = vmul.f32 %v882, 1.442695
        %v1002 = vpow.pop %v1001
        %v1003 = vmul.f32 %v883, 1.442695
        %v1004 = vpow.pop %v1003
        %v1005 = vmul.f32 %v884, 1.442695
        %v1006 = vpow.pop %v1005
        %v1007 = vmul.f32 %v885, 1.442695
        %v1008 = vpow.pop %v1007
        %v1009 = vmul.f32 %v886, 1.442695
        %v1010 = vpow.pop %v1009
        %v1011 = vmul.f32 %v887, 1.442695
        %v1012 = vpow.pop %v1011
        %v1013 = vmul.f32 %v888, 1.442695
        %v1014 = vpow.pop %v1013
        %v1015 = vmul.f32 %v889, 1.442695
        %v1016 = vpow.pop %v1015
        %v1017 = vmul.f32 %v890, 1.442695
        %v1018 = vpow.pop %v1017
        %v1019 = vmul.f32 %v891, 1.442695
        %v1020 = vpow.pop %v1019
        %v1021 = vmul.f32 %v892, 1.442695
        %v1022 = vpow.pop %v1021
        %v1023 = vmul.f32 %v893, 1.442695
        %v1024 = vpow.pop %v1023
        %v1025 = vmul.f32 %v894, 1.442695
        %v1026 = vpow.pop %v1025
        %v1027 = vmul.f32 %v895, 1.442695
        %v1028 = vpow.pop %v1027
        %v1029 = vmul.f32 %v896, 1.442695
        %v1030 = vpow.pop %v1029
        %v1031 = vmul.f32 %v897, 1.442695
        %v1032 = vpow.pop %v1031
        %v1033 = vmul.f32 %v898, 1.442695
        %v1034 = vpow.pop %v1033
        %v1035 = vmul.f32 %v899, 1.442695
        %v1036 = vpow.pop %v1035
        %v1037 = vmul.f32 %v900, 1.442695
        %v1038 = vpow.pop %v1037
        %v1039 = vmul.f32 %v901, 1.442695
        %v1040 = vpow.pop %v1039
        %v1041 = vmul.f32 %v902, 1.442695
        %v1042 = vpow.pop %v1041
        %v1043 = vmul.f32 %v903, 1.442695
        %v1044 = vpow.pop %v1043
        %v1045 = vmul.f32 %v904, 1.442695
        %v1046 = vpow.pop %v1045
        %v1047 = vmul.f32 %v905, 1.442695
        %v1048 = vpow.pop %v1047
        %v1049 = vmul.f32 %v906, 1.442695
        %v1050 = vpow.pop %v1049
        %v1051 = vmul.f32 %v907, 1.442695
        %v1052 = vpow.pop %v1051
        %v1053 = vmul.f32 %v908, 1.442695
        %v1054 = vpow.pop %v1053
        %v1055 = vmul.f32 %v909, 1.442695
        %v1056 = vpow.pop %v1055
        %v1057 = vmul.f32 %v910, 1.442695
        %v1058 = vpow.pop %v1057
        %v1059 = vmul.f32 %v911, 1.442695
        %v1060 = vpow.pop %v1059
        %v1061 = vmul.f32 %v912, 1.442695
        %v1062 = vpow.pop %v1061
        %v1063 = vmul.f32 %v913, 1.442695
        %v1064 = vpow.pop %v1063
        %v1065 = vmul.f32 %v914, 1.442695
        %v1066 = vpow.pop %v1065
        %v1067 = vmul.f32 %v915, 1.442695
        %v1068 = vpow.pop %v1067
        %v1069 = vmul.f32 %v916, 1.442695
        %v1070 = vpow.pop %v1069
        %v1071 = vmul.f32 %v917, 1.442695
        %v1072 = vpow.pop %v1071
        %v1073 = vmul.f32 %v918, 1.442695
        %v1074 = vpow.pop %v1073
        %v1075 = vmul.f32 %v919, 1.442695
        %v1076 = vpow.pop %v1075
        %v1077 = vmul.f32 %v920, 1.442695
        %v1078 = vpow.pop %v1077
        %v1079 = vmul.f32 %v921, 1.442695
        %v1080 = vpow.pop %v1079
        %v1081 = vmul.f32 %v922, 1.442695
        %v1082 = vpow.pop %v1081
        %v1083 = vmul.f32 %v923, 1.442695
        %v1084 = vpow.pop %v1083
        %v1085 = vmul.f32 %v924, 1.442695
        %v1086 = vpow.pop %v1085
        %v1087 = vmul.f32 %v925, 1.442695
        %v1088 = vpow.pop %v1087
        %v1089 = vmul.f32 %v926, 1.442695
        %v1090 = vpow.pop %v1089
        %v1091 = vmul.f32 %v927, 1.442695
        %v1092 = vpow.pop %v1091
        %v1093 = vmul.f32 %v928, 1.442695
        %v1094 = vpow.pop %v1093
        %v1095 = vmul.f32 %v929, 1.442695
        %v1096 = vpow.pop %v1095
        %v1097 = vmul.f32 %v930, 1.442695
        %v1098 = vpow.pop %v1097
        %v1099 = vmul.f32 %v931, 1.442695
        %v1100 = vpow.pop %v1099
        %v1101 = vmul.f32 %v932, 1.442695
        %v1102 = vpow.pop %v1101
        %v1103 = vmul.f32 %v933, 1.442695
        %v1104 = vpow.pop %v1103
        %v1105 = vmul.f32 %v934, 1.442695
        %v1106 = vpow.pop %v1105
        %v1107 = vmul.f32 %v935, 1.442695
        %v1108 = vpow.pop %v1107
        %v1109 = vmul.f32 %v936, 1.442695
        %v1110 = vpow.pop %v1109
        %v1111 = vmul.f32 %v937, 1.442695
        %v1112 = vpow.pop %v1111
        %v1113 = vmul.f32 %v938, 1.442695
        %v1114 = vpow.pop %v1113
        %v1115 = vmul.f32 %v939, 1.442695
        %v1116 = vpow.pop %v1115
        %v1117 = vmul.f32 %v940, 1.442695
        %v1118 = vpow.pop %v1117
        %v1119 = vmul.f32 %v941, 1.442695
        %v1120 = vpow.pop %v1119
        %v1121 = vmul.f32 %v942, 1.442695
        %v1122 = vpow.pop %v1121
        %v1123 = vmul.f32 %v943, 1.442695
        %v1124 = vpow.pop %v1123
        %v1125 = vmul.f32 %v944, 1.442695
        %v1126 = vpow.pop %v1125
        %v1127 = vmul.f32 %v945, 1.442695
        %v1128 = vpow.pop %v1127
        %v1129 = vmul.f32 %v946, 1.442695
        %v1130 = vpow.pop %v1129
        %v1131 = vmul.f32 %v947, 1.442695
        %v1132 = vpow.pop %v1131
        %v1133 = vmul.f32 %v948, 1.442695
        %v1134 = vpow.pop %v1133
        %v1135 = vmul.f32 %v949, 1.442695
        %v1136 = vpow.pop %v1135
        %v1137 = vmul.f32 %v950, 1.442695
        %v1138 = vpow.pop %v1137
        %v1139 = vmul.f32 %v951, 1.442695
        %v1140 = vpow.pop %v1139
        %v1141 = vmul.f32 %v952, 1.442695
        %v1142 = vpow.pop %v1141
        %v1143 = vmul.f32 %v953, 1.442695
        %v1144 = vpow.pop %v1143
        %v1145 = vmul.f32 %v954, 1.442695
        %v1146 = vpow.pop %v1145
        %v1147 = vmul.f32 %v955, 1.442695
        %v1148 = vpow.pop %v1147
        %v1149 = vmul.f32 %v956, 1.442695
        %v1150 = vpow.pop %v1149
        %v1151 = vmul.f32 %v957, 1.442695
        %v1152 = vpow.pop %v1151
        %v1153 = vmul.f32 %v958, 1.442695
        %v1154 = vpow.pop %v1153
        %v1155 = vmul.f32 %v959, 1.442695
        %v1156 = vpow.pop %v1155
        %v1157 = vmul.f32 %v960, 1.442695
        %v1158 = vpow.pop %v1157
        %v1159 = vmul.f32 %v961, 1.442695
        %v1160 = vpow.pop %v1159
        %v1161 = vmul.f32 %v962, 1.442695
        %v1162 = vpow.pop %v1161
        %v1163 = vmul.f32 %v963, 1.442695
        %v1164 = vpow.pop %v1163
        %v1165 = vmul.f32 %v964, 1.442695
        %v1166 = vpow.pop %v1165
        %v1167 = vmul.f32 %v965, 1.442695
        %v1168 = vpow.pop %v1167
        %v1169 = vmul.f32 %v966, 1.442695
        %v1170 = vpow.pop %v1169
        %v1171 = vmul.f32 %v967, 1.442695
        %v1172 = vpow.pop %v1171
        %v1173 = vmul.f32 %v968, 1.442695
        %v1174 = vpow.pop %v1173
        %v1175 = vmul.f32 %v969, 1.442695
        %v1176 = vpow.pop %v1175
        %v1177 = vmul.f32 %v970, 1.442695
        %v1178 = vpow.pop %v1177
        %v1179 = vmul.f32 %v971, 1.442695
        %v1180 = vpow.pop %v1179
        %v1181 = vmul.f32 %v972, 1.442695
        %v1182 = vpow.pop %v1181
        %v1183 = vmul.f32 %v973, 1.442695
        %v1184 = vpow.pop %v1183
        %v1185 = vmul.f32 %v974, 1.442695
        %v1186 = vpow.pop %v1185
        %v1187 = vmul.f32 %v975, 1.442695
        %v1188 = vpow.pop %v1187
        %v1189 = vmul.f32 %v976, 1.442695
        %v1190 = vpow.pop %v1189
        %v1191 = vmul.f32 %v977, 1.442695
        %v1192 = vpow.pop %v1191
        %v1193 = vmul.f32 %v978, 1.442695
        %v1194 = vpow.pop %v1193
        %v1195 = vmul.f32 %v979, 1.442695
        %v1196 = vpow.pop %v1195
        %v1197 = vmul.f32 %v980, 1.442695
        %v1198 = vpow.pop %v1197
        %v1199 = vmul.f32 %v981, 1.442695
        %v1200 = vpow.pop %v1199
        %v1201 = vmul.f32 %v982, 1.442695
        %v1202 = vpow.pop %v1201
        %v1203 = vmul.f32 %v983, 1.442695
        %v1204 = vpow.pop %v1203
        %v1205 = vmul.f32 %v984, 1.442695
        %v1206 = vpow.pop %v1205
        %v1207 = vmul.f32 %v985, 1.442695
        %v1208 = vpow.pop %v1207
        %v1209 = vmul.f32 %v986, 1.442695
        %v1210 = vpow.pop %v1209
        %v1211 = vadd.f32 %v988, 1.0
        %v1212 = vadd.f32 %v990, 1.0
        %v1213 = vadd.f32 %v992, 1.0
        %v1214 = vadd.f32 %v994, 1.0
        %v1215 = vadd.f32 %v996, 1.0
        %v1216 = vadd.f32 %v998, 1.0
        %v1217 = vadd.f32 %v1000, 1.0
        %v1218 = vadd.f32 %v1002, 1.0
        %v1219 = vadd.f32 %v1004, 1.0
        %v1220 = vadd.f32 %v1006, 1.0
        %v1221 = vadd.f32 %v1008, 1.0
        %v1222 = vadd.f32 %v1010, 1.0
        %v1223 = vadd.f32 %v1012, 1.0
        %v1224 = vadd.f32 %v1014, 1.0
        %v1225 = vadd.f32 %v1016, 1.0
        %v1226 = vadd.f32 %v1018, 1.0
        %v1227 = vadd.f32 %v1020, 1.0
        %v1228 = vadd.f32 %v1022, 1.0
        %v1229 = vadd.f32 %v1024, 1.0
        %v1230 = vadd.f32 %v1026, 1.0
        %v1231 = vadd.f32 %v1028, 1.0
        %v1232 = vadd.f32 %v1030, 1.0
        %v1233 = vadd.f32 %v1032, 1.0
        %v1234 = vadd.f32 %v1034, 1.0
        %v1235 = vadd.f32 %v1036, 1.0
        %v1236 = vadd.f32 %v1038, 1.0
        %v1237 = vadd.f32 %v1040, 1.0
        %v1238 = vadd.f32 %v1042, 1.0
        %v1239 = vadd.f32 %v1044, 1.0
        %v1240 = vadd.f32 %v1046, 1.0
        %v1241 = vadd.f32 %v1048, 1.0
        %v1242 = vadd.f32 %v1050, 1.0
        %v1243 = vadd.f32 %v1052, 1.0
        %v1244 = vadd.f32 %v1054, 1.0
        %v1245 = vadd.f32 %v1056, 1.0
        %v1246 = vadd.f32 %v1058, 1.0
        %v1247 = vadd.f32 %v1060, 1.0
        %v1248 = vadd.f32 %v1062, 1.0
        %v1249 = vadd.f32 %v1064, 1.0
        %v1250 = vadd.f32 %v1066, 1.0
        %v1251 = vadd.f32 %v1068, 1.0
        %v1252 = vadd.f32 %v1070, 1.0
        %v1253 = vadd.f32 %v1072, 1.0
        %v1254 = vadd.f32 %v1074, 1.0
        %v1255 = vadd.f32 %v1076, 1.0
        %v1256 = vadd.f32 %v1078, 1.0
        %v1257 = vadd.f32 %v1080, 1.0
        %v1258 = vadd.f32 %v1082, 1.0
        %v1259 = vadd.f32 %v1084, 1.0
        %v1260 = vadd.f32 %v1086, 1.0
        %v1261 = vadd.f32 %v1088, 1.0
        %v1262 = vadd.f32 %v1090, 1.0
        %v1263 = vadd.f32 %v1092, 1.0
        %v1264 = vadd.f32 %v1094, 1.0
        %v1265 = vadd.f32 %v1096, 1.0
        %v1266 = vadd.f32 %v1098, 1.0
        %v1267 = vadd.f32 %v1100, 1.0
        %v1268 = vadd.f32 %v1102, 1.0
        %v1269 = vadd.f32 %v1104, 1.0
        %v1270 = vadd.f32 %v1106, 1.0
        %v1271 = vadd.f32 %v1108, 1.0
        %v1272 = vadd.f32 %v1110, 1.0
        %v1273 = vadd.f32 %v1112, 1.0
        %v1274 = vadd.f32 %v1114, 1.0
        %v1275 = vadd.f32 %v1116, 1.0
        %v1276 = vadd.f32 %v1118, 1.0
        %v1277 = vadd.f32 %v1120, 1.0
        %v1278 = vadd.f32 %v1122, 1.0
        %v1279 = vadd.f32 %v1124, 1.0
        %v1280 = vadd.f32 %v1126, 1.0
        %v1281 = vadd.f32 %v1128, 1.0
        %v1282 = vadd.f32 %v1130, 1.0
        %v1283 = vadd.f32 %v1132, 1.0
        %v1284 = vadd.f32 %v1134, 1.0
        %v1285 = vadd.f32 %v1136, 1.0
        %v1286 = vadd.f32 %v1138, 1.0
        %v1287 = vadd.f32 %v1140, 1.0
        %v1288 = vadd.f32 %v1142, 1.0
        %v1289 = vadd.f32 %v1144, 1.0
        %v1290 = vadd.f32 %v1146, 1.0
        %v1291 = vadd.f32 %v1148, 1.0
        %v1292 = vadd.f32 %v1150, 1.0
        %v1293 = vadd.f32 %v1152, 1.0
        %v1294 = vadd.f32 %v1154, 1.0
        %v1295 = vadd.f32 %v1156, 1.0
        %v1296 = vadd.f32 %v1158, 1.0
        %v1297 = vadd.f32 %v1160, 1.0
        %v1298 = vadd.f32 %v1162, 1.0
        %v1299 = vadd.f32 %v1164, 1.0
        %v1300 = vadd.f32 %v1166, 1.0
        %v1301 = vadd.f32 %v1168, 1.0
        %v1302 = vadd.f32 %v1170, 1.0
        %v1303 = vadd.f32 %v1172, 1.0
        %v1304 = vadd.f32 %v1174, 1.0
        %v1305 = vadd.f32 %v1176, 1.0
        %v1306 = vadd.f32 %v1178, 1.0
        %v1307 = vadd.f32 %v1180, 1.0
        %v1308 = vadd.f32 %v1182, 1.0
        %v1309 = vadd.f32 %v1184, 1.0
        %v1310 = vadd.f32 %v1186, 1.0
        %v1311 = vadd.f32 %v1188, 1.0
        %v1312 = vadd.f32 %v1190, 1.0
        %v1313 = vadd.f32 %v1192, 1.0
        %v1314 = vadd.f32 %v1194, 1.0
        %v1315 = vadd.f32 %v1196, 1.0
        %v1316 = vadd.f32 %v1198, 1.0
        %v1317 = vadd.f32 %v1200, 1.0
        %v1318 = vadd.f32 %v1202, 1.0
        %v1319 = vadd.f32 %v1204, 1.0
        %v1320 = vadd.f32 %v1206, 1.0
        %v1321 = vadd.f32 %v1208, 1.0
        %v1322 = vadd.f32 %v1210, 1.0
        %v1323 = vrcp.pop %v1211
        %v1324 = vmul.f32 1.0, %v1323
        %v1325 = vrcp.pop %v1212
        %v1326 = vmul.f32 1.0, %v1325
        %v1327 = vrcp.pop %v1213
        %v1328 = vmul.f32 1.0, %v1327
        %v1329 = vrcp.pop %v1214
        %v1330 = vmul.f32 1.0, %v1329
        %v1331 = vrcp.pop %v1215
        %v1332 = vmul.f32 1.0, %v1331
        %v1333 = vrcp.pop %v1216
        %v1334 = vmul.f32 1.0, %v1333
        %v1335 = vrcp.pop %v1217
        %v1336 = vmul.f32 1.0, %v1335
        %v1337 = vrcp.pop %v1218
        %v1338 = vmul.f32 1.0, %v1337
        %v1339 = vrcp.pop %v1219
        %v1340 = vmul.f32 1.0, %v1339
        %v1341 = vrcp.pop %v1220
        %v1342 = vmul.f32 1.0, %v1341
        %v1343 = vrcp.pop %v1221
        %v1344 = vmul.f32 1.0, %v1343
        %v1345 = vrcp.pop %v1222
        %v1346 = vmul.f32 1.0, %v1345
        %v1347 = vrcp.pop %v1223
        %v1348 = vmul.f32 1.0, %v1347
        %v1349 = vrcp.pop %v1224
        %v1350 = vmul.f32 1.0, %v1349
        %v1351 = vrcp.pop %v1225
        %v1352 = vmul.f32 1.0, %v1351
        %v1353 = vrcp.pop %v1226
        %v1354 = vmul.f32 1.0, %v1353
        %v1355 = vrcp.pop %v1227
        %v1356 = vmul.f32 1.0, %v1355
        %v1357 = vrcp.pop %v1228
        %v1358 = vmul.f32 1.0, %v1357
        %v1359 = vrcp.pop %v1229
        %v1360 = vmul.f32 1.0, %v1359
        %v1361 = vrcp.pop %v1230
        %v1362 = vmul.f32 1.0, %v1361
        %v1363 = vrcp.pop %v1231
        %v1364 = vmul.f32 1.0, %v1363
        %v1365 = vrcp.pop %v1232
        %v1366 = vmul.f32 1.0, %v1365
        %v1367 = vrcp.pop %v1233
        %v1368 = vmul.f32 1.0, %v1367
        %v1369 = vrcp.pop %v1234
        %v1370 = vmul.f32 1.0, %v1369
        %v1371 = vrcp.pop %v1235
        %v1372 = vmul.f32 1.0, %v1371
        %v1373 = vrcp.pop %v1236
        %v1374 = vmul.f32 1.0, %v1373
        %v1375 = vrcp.pop %v1237
        %v1376 = vmul.f32 1.0, %v1375
        %v1377 = vrcp.pop %v1238
        %v1378 = vmul.f32 1.0, %v1377
        %v1379 = vrcp.pop %v1239
        %v1380 = vmul.f32 1.0, %v1379
        %v1381 = vrcp.pop %v1240
        %v1382 = vmul.f32 1.0, %v1381
        %v1383 = vrcp.pop %v1241
        %v1384 = vmul.f32 1.0, %v1383
        %v1385 = vrcp.pop %v1242
        %v1386 = vmul.f32 1.0, %v1385
        %v1387 = vrcp.pop %v1243
        %v1388 = vmul.f32 1.0, %v1387
        %v1389 = vrcp.pop %v1244
        %v1390 = vmul.f32 1.0, %v1389
        %v1391 = vrcp.pop %v1245
        %v1392 = vmul.f32 1.0, %v1391
        %v1393 = vrcp.pop %v1246
        %v1394 = vmul.f32 1.0, %v1393
        %v1395 = vrcp.pop %v1247
        %v1396 = vmul.f32 1.0, %v1395
        %v1397 = vrcp.pop %v1248
        %v1398 = vmul.f32 1.0, %v1397
        %v1399 = vrcp.pop %v1249
        %v1400 = vmul.f32 1.0, %v1399
        %v1401 = vrcp.pop %v1250
        %v1402 = vmul.f32 1.0, %v1401
        %v1403 = vrcp.pop %v1251
        %v1404 = vmul.f32 1.0, %v1403
        %v1405 = vrcp.pop %v1252
        %v1406 = vmul.f32 1.0, %v1405
        %v1407 = vrcp.pop %v1253
        %v1408 = vmul.f32 1.0, %v1407
        %v1409 = vrcp.pop %v1254
        %v1410 = vmul.f32 1.0, %v1409
        %v1411 = vrcp.pop %v1255
        %v1412 = vmul.f32 1.0, %v1411
        %v1413 = vrcp.pop %v1256
        %v1414 = vmul.f32 1.0, %v1413
        %v1415 = vrcp.pop %v1257
        %v1416 = vmul.f32 1.0, %v1415
        %v1417 = vrcp.pop %v1258
        %v1418 = vmul.f32 1.0, %v1417
        %v1419 = vrcp.pop %v1259
        %v1420 = vmul.f32 1.0, %v1419
        %v1421 = vrcp.pop %v1260
        %v1422 = vmul.f32 1.0, %v1421
        %v1423 = vrcp.pop %v1261
        %v1424 = vmul.f32 1.0, %v1423
        %v1425 = vrcp.pop %v1262
        %v1426 = vmul.f32 1.0, %v1425
        %v1427 = vrcp.pop %v1263
        %v1428 = vmul.f32 1.0, %v1427
        %v1429 = vrcp.pop %v1264
        %v1430 = vmul.f32 1.0, %v1429
        %v1431 = vrcp.pop %v1265
        %v1432 = vmul.f32 1.0, %v1431
        %v1433 = vrcp.pop %v1266
        %v1434 = vmul.f32 1.0, %v1433
        %v1435 = vrcp.pop %v1267
        %v1436 = vmul.f32 1.0, %v1435
        %v1437 = vrcp.pop %v1268
        %v1438 = vmul.f32 1.0, %v1437
        %v1439 = vrcp.pop %v1269
        %v1440 = vmul.f32 1.0, %v1439
        %v1441 = vrcp.pop %v1270
        %v1442 = vmul.f32 1.0, %v1441
        %v1443 = vrcp.pop %v1271
        %v1444 = vmul.f32 1.0, %v1443
        %v1445 = vrcp.pop %v1272
        %v1446 = vmul.f32 1.0, %v1445
        %v1447 = vrcp.pop %v1273
        %v1448 = vmul.f32 1.0, %v1447
        %v1449 = vrcp.pop %v1274
        %v1450 = vmul.f32 1.0, %v1449
        %v1451 = vrcp.pop %v1275
        %v1452 = vmul.f32 1.0, %v1451
        %v1453 = vrcp.pop %v1276
        %v1454 = vmul.f32 1.0, %v1453
        %v1455 = vrcp.pop %v1277
        %v1456 = vmul.f32 1.0, %v1455
        %v1457 = vrcp.pop %v1278
        %v1458 = vmul.f32 1.0, %v1457
        %v1459 = vrcp.pop %v1279
        %v1460 = vmul.f32 1.0, %v1459
        %v1461 = vrcp.pop %v1280
        %v1462 = vmul.f32 1.0, %v1461
        %v1463 = vrcp.pop %v1281
        %v1464 = vmul.f32 1.0, %v1463
        %v1465 = vrcp.pop %v1282
        %v1466 = vmul.f32 1.0, %v1465
        %v1467 = vrcp.pop %v1283
        %v1468 = vmul.f32 1.0, %v1467
        %v1469 = vrcp.pop %v1284
        %v1470 = vmul.f32 1.0, %v1469
        %v1471 = vrcp.pop %v1285
        %v1472 = vmul.f32 1.0, %v1471
        %v1473 = vrcp.pop %v1286
        %v1474 = vmul.f32 1.0, %v1473
        %v1475 = vrcp.pop %v1287
        %v1476 = vmul.f32 1.0, %v1475
        %v1477 = vrcp.pop %v1288
        %v1478 = vmul.f32 1.0, %v1477
        %v1479 = vrcp.pop %v1289
        %v1480 = vmul.f32 1.0, %v1479
        %v1481 = vrcp.pop %v1290
        %v1482 = vmul.f32 1.0, %v1481
        %v1483 = vrcp.pop %v1291
        %v1484 = vmul.f32 1.0, %v1483
        %v1485 = vrcp.pop %v1292
        %v1486 = vmul.f32 1.0, %v1485
        %v1487 = vrcp.pop %v1293
        %v1488 = vmul.f32 1.0, %v1487
        %v1489 = vrcp.pop %v1294
        %v1490 = vmul.f32 1.0, %v1489
        %v1491 = vrcp.pop %v1295
        %v1492 = vmul.f32 1.0, %v1491
        %v1493 = vrcp.pop %v1296
        %v1494 = vmul.f32 1.0, %v1493
        %v1495 = vrcp.pop %v1297
        %v1496 = vmul.f32 1.0, %v1495
        %v1497 = vrcp.pop %v1298
        %v1498 = vmul.f32 1.0, %v1497
        %v1499 = vrcp.pop %v1299
        %v1500 = vmul.f32 1.0, %v1499
        %v1501 = vrcp.pop %v1300
        %v1502 = vmul.f32 1.0, %v1501
        %v1503 = vrcp.pop %v1301
        %v1504 = vmul.f32 1.0, %v1503
        %v1505 = vrcp.pop %v1302
        %v1506 = vmul.f32 1.0, %v1505
        %v1507 = vrcp.pop %v1303
        %v1508 = vmul.f32 1.0, %v1507
        %v1509 = vrcp.pop %v1304
        %v1510 = vmul.f32 1.0, %v1509
        %v1511 = vrcp.pop %v1305
        %v1512 = vmul.f32 1.0, %v1511
        %v1513 = vrcp.pop %v1306
        %v1514 = vmul.f32 1.0, %v1513
        %v1515 = vrcp.pop %v1307
        %v1516 = vmul.f32 1.0, %v1515
        %v1517 = vrcp.pop %v1308
        %v1518 = vmul.f32 1.0, %v1517
        %v1519 = vrcp.pop %v1309
        %v1520 = vmul.f32 1.0, %v1519
        %v1521 = vrcp.pop %v1310
        %v1522 = vmul.f32 1.0, %v1521
        %v1523 = vrcp.pop %v1311
        %v1524 = vmul.f32 1.0, %v1523
        %v1525 = vrcp.pop %v1312
        %v1526 = vmul.f32 1.0, %v1525
        %v1527 = vrcp.pop %v1313
        %v1528 = vmul.f32 1.0, %v1527
        %v1529 = vrcp.pop %v1314
        %v1530 = vmul.f32 1.0, %v1529
        %v1531 = vrcp.pop %v1315
        %v1532 = vmul.f32 1.0, %v1531
        %v1533 = vrcp.pop %v1316
        %v1534 = vmul.f32 1.0, %v1533
        %v1535 = vrcp.pop %v1317
        %v1536 = vmul.f32 1.0, %v1535
        %v1537 = vrcp.pop %v1318
        %v1538 = vmul.f32 1.0, %v1537
        %v1539 = vrcp.pop %v1319
        %v1540 = vmul.f32 1.0, %v1539
        %v1541 = vrcp.pop %v1320
        %v1542 = vmul.f32 1.0, %v1541
        %v1543 = vrcp.pop %v1321
        %v1544 = vmul.f32 1.0, %v1543
        %v1545 = vrcp.pop %v1322
        %v1546 = vmul.f32 1.0, %v1545
        %vm1547 = vcmask 7168
        %1548 = vst.msk [vmem:[%s173] sm:$0xff] %vm1547, %v1324
        %1549 = vst.msk [vmem:[%s173 + $0x8] sm:$0xff] %vm1547, %v1326
        %1550 = vst.msk [vmem:[%s173 + $0x10] sm:$0xff] %vm1547, %v1328
        %1551 = vst.msk [vmem:[%s173 + $0x18] sm:$0xff] %vm1547, %v1330
        %1552 = vst.msk [vmem:[%s173 + $0x20] sm:$0xff] %vm1547, %v1332
        %1553 = vst.msk [vmem:[%s173 + $0x28] sm:$0xff] %vm1547, %v1334
        %1554 = vst.msk [vmem:[%s173 + $0x30] sm:$0xff] %vm1547, %v1336
        %1555 = vst.msk [vmem:[%s173 + $0x38] sm:$0xff] %vm1547, %v1338
        %1556 = vst.msk [vmem:[%s173 + $0x40] sm:$0xff] %vm1547, %v1340
        %1557 = vst.msk [vmem:[%s173 + $0x48] sm:$0xff] %vm1547, %v1342
        %1558 = vst.msk [vmem:[%s173 + $0x50] sm:$0xff] %vm1547, %v1344
        %1559 = vst.msk [vmem:[%s173 + $0x58] sm:$0xff] %vm1547, %v1346
        %1560 = vst.msk [vmem:[%s173 + $0x60] sm:$0xff] %vm1547, %v1348
        %1561 = vst.msk [vmem:[%s173 + $0x68] sm:$0xff] %vm1547, %v1350
        %1562 = vst.msk [vmem:[%s173 + $0x70] sm:$0xff] %vm1547, %v1352
        %1563 = vst.msk [vmem:[%s173 + $0x78] sm:$0xff] %vm1547, %v1354
        %1564 = vst.msk [vmem:[%s173 + $0x80] sm:$0xff] %vm1547, %v1356
        %1565 = vst.msk [vmem:[%s173 + $0x88] sm:$0xff] %vm1547, %v1358
        %1566 = vst.msk [vmem:[%s173 + $0x90] sm:$0xff] %vm1547, %v1360
        %1567 = vst.msk [vmem:[%s173 + $0x98] sm:$0xff] %vm1547, %v1362
        %1568 = vst.msk [vmem:[%s173 + $0xa0] sm:$0xff] %vm1547, %v1364
        %1569 = vst.msk [vmem:[%s173 + $0xa8] sm:$0xff] %vm1547, %v1366
        %1570 = vst.msk [vmem:[%s173 + $0xb0] sm:$0xff] %vm1547, %v1368
        %1571 = vst.msk [vmem:[%s173 + $0xb8] sm:$0xff] %vm1547, %v1370
        %1572 = vst.msk [vmem:[%s173 + $0xc0] sm:$0xff] %vm1547, %v1372
        %1573 = vst.msk [vmem:[%s173 + $0xc8] sm:$0xff] %vm1547, %v1374
        %1574 = vst.msk [vmem:[%s173 + $0xd0] sm:$0xff] %vm1547, %v1376
        %1575 = vst.msk [vmem:[%s173 + $0xd8] sm:$0xff] %vm1547, %v1378
        %1576 = vst.msk [vmem:[%s173 + $0xe0] sm:$0xff] %vm1547, %v1380
        %1577 = vst.msk [vmem:[%s173 + $0xe8] sm:$0xff] %vm1547, %v1382
        %1578 = vst.msk [vmem:[%s173 + $0xf0] sm:$0xff] %vm1547, %v1384
        %1579 = vst.msk [vmem:[%s173 + $0xf8] sm:$0xff] %vm1547, %v1386
        %1580 = vst.msk [vmem:[%s173 + $0x100] sm:$0xff] %vm1547, %v1388
        %1581 = vst.msk [vmem:[%s173 + $0x108] sm:$0xff] %vm1547, %v1390
        %1582 = vst.msk [vmem:[%s173 + $0x110] sm:$0xff] %vm1547, %v1392
        %1583 = vst.msk [vmem:[%s173 + $0x118] sm:$0xff] %vm1547, %v1394
        %1584 = vst.msk [vmem:[%s173 + $0x120] sm:$0xff] %vm1547, %v1396
        %1585 = vst.msk [vmem:[%s173 + $0x128] sm:$0xff] %vm1547, %v1398
        %1586 = vst.msk [vmem:[%s173 + $0x130] sm:$0xff] %vm1547, %v1400
        %1587 = vst.msk [vmem:[%s173 + $0x138] sm:$0xff] %vm1547, %v1402
        %1588 = vst.msk [vmem:[%s173 + $0x140] sm:$0xff] %vm1547, %v1404
        %1589 = vst.msk [vmem:[%s173 + $0x148] sm:$0xff] %vm1547, %v1406
        %1590 = vst.msk [vmem:[%s173 + $0x150] sm:$0xff] %vm1547, %v1408
        %1591 = vst.msk [vmem:[%s173 + $0x158] sm:$0xff] %vm1547, %v1410
        %1592 = vst.msk [vmem:[%s173 + $0x160] sm:$0xff] %vm1547, %v1412
        %1593 = vst.msk [vmem:[%s173 + $0x168] sm:$0xff] %vm1547, %v1414
        %1594 = vst.msk [vmem:[%s173 + $0x170] sm:$0xff] %vm1547, %v1416
        %1595 = vst.msk [vmem:[%s173 + $0x178] sm:$0xff] %vm1547, %v1418
        %1596 = vst.msk [vmem:[%s173 + $0x180] sm:$0xff] %vm1547, %v1420
        %1597 = vst.msk [vmem:[%s173 + $0x188] sm:$0xff] %vm1547, %v1422
        %1598 = vst.msk [vmem:[%s173 + $0x190] sm:$0xff] %vm1547, %v1424
        %1599 = vst.msk [vmem:[%s173 + $0x198] sm:$0xff] %vm1547, %v1426
        %1600 = vst.msk [vmem:[%s173 + $0x1a0] sm:$0xff] %vm1547, %v1428
        %1601 = vst.msk [vmem:[%s173 + $0x1a8] sm:$0xff] %vm1547, %v1430
        %1602 = vst.msk [vmem:[%s173 + $0x1b0] sm:$0xff] %vm1547, %v1432
        %1603 = vst.msk [vmem:[%s173 + $0x1b8] sm:$0xff] %vm1547, %v1434
        %1604 = vst.msk [vmem:[%s173 + $0x1c0] sm:$0xff] %vm1547, %v1436
        %1605 = vst.msk [vmem:[%s173 + $0x1c8] sm:$0xff] %vm1547, %v1438
        %1606 = vst.msk [vmem:[%s173 + $0x1d0] sm:$0xff] %vm1547, %v1440
        %1607 = vst.msk [vmem:[%s173 + $0x1d8] sm:$0xff] %vm1547, %v1442
        %1608 = vst.msk [vmem:[%s173 + $0x1e0] sm:$0xff] %vm1547, %v1444
        %1609 = vst.msk [vmem:[%s173 + $0x1e8] sm:$0xff] %vm1547, %v1446
        %1610 = vst.msk [vmem:[%s173 + $0x1f0] sm:$0xff] %vm1547, %v1448
        %1611 = vst.msk [vmem:[%s173 + $0x1f8] sm:$0xff] %vm1547, %v1450
        %1612 = vst.msk [vmem:[%s173 + $0x200] sm:$0xff] %vm1547, %v1452
        %1613 = vst.msk [vmem:[%s173 + $0x208] sm:$0xff] %vm1547, %v1454
        %1614 = vst.msk [vmem:[%s173 + $0x210] sm:$0xff] %vm1547, %v1456
        %1615 = vst.msk [vmem:[%s173 + $0x218] sm:$0xff] %vm1547, %v1458
        %1616 = vst.msk [vmem:[%s173 + $0x220] sm:$0xff] %vm1547, %v1460
        %1617 = vst.msk [vmem:[%s173 + $0x228] sm:$0xff] %vm1547, %v1462
        %1618 = vst.msk [vmem:[%s173 + $0x230] sm:$0xff] %vm1547, %v1464
        %1619 = vst.msk [vmem:[%s173 + $0x238] sm:$0xff] %vm1547, %v1466
        %1620 = vst.msk [vmem:[%s173 + $0x240] sm:$0xff] %vm1547, %v1468
        %1621 = vst.msk [vmem:[%s173 + $0x248] sm:$0xff] %vm1547, %v1470
        %1622 = vst.msk [vmem:[%s173 + $0x250] sm:$0xff] %vm1547, %v1472
        %1623 = vst.msk [vmem:[%s173 + $0x258] sm:$0xff] %vm1547, %v1474
        %1624 = vst.msk [vmem:[%s173 + $0x260] sm:$0xff] %vm1547, %v1476
        %1625 = vst.msk [vmem:[%s173 + $0x268] sm:$0xff] %vm1547, %v1478
        %1626 = vst.msk [vmem:[%s173 + $0x270] sm:$0xff] %vm1547, %v1480
        %1627 = vst.msk [vmem:[%s173 + $0x278] sm:$0xff] %vm1547, %v1482
        %1628 = vst.msk [vmem:[%s173 + $0x280] sm:$0xff] %vm1547, %v1484
        %1629 = vst.msk [vmem:[%s173 + $0x288] sm:$0xff] %vm1547, %v1486
        %1630 = vst.msk [vmem:[%s173 + $0x290] sm:$0xff] %vm1547, %v1488
        %1631 = vst.msk [vmem:[%s173 + $0x298] sm:$0xff] %vm1547, %v1490
        %1632 = vst.msk [vmem:[%s173 + $0x2a0] sm:$0xff] %vm1547, %v1492
        %1633 = vst.msk [vmem:[%s173 + $0x2a8] sm:$0xff] %vm1547, %v1494
        %1634 = vst.msk [vmem:[%s173 + $0x2b0] sm:$0xff] %vm1547, %v1496
        %1635 = vst.msk [vmem:[%s173 + $0x2b8] sm:$0xff] %vm1547, %v1498
        %1636 = vst.msk [vmem:[%s173 + $0x2c0] sm:$0xff] %vm1547, %v1500
        %1637 = vst.msk [vmem:[%s173 + $0x2c8] sm:$0xff] %vm1547, %v1502
        %1638 = vst.msk [vmem:[%s173 + $0x2d0] sm:$0xff] %vm1547, %v1504
        %1639 = vst.msk [vmem:[%s173 + $0x2d8] sm:$0xff] %vm1547, %v1506
        %1640 = vst.msk [vmem:[%s173 + $0x2e0] sm:$0xff] %vm1547, %v1508
        %1641 = vst.msk [vmem:[%s173 + $0x2e8] sm:$0xff] %vm1547, %v1510
        %1642 = vst.msk [vmem:[%s173 + $0x2f0] sm:$0xff] %vm1547, %v1512
        %1643 = vst.msk [vmem:[%s173 + $0x2f8] sm:$0xff] %vm1547, %v1514
        %1644 = vst.msk [vmem:[%s173 + $0x300] sm:$0xff] %vm1547, %v1516
        %1645 = vst.msk [vmem:[%s173 + $0x308] sm:$0xff] %vm1547, %v1518
        %1646 = vst.msk [vmem:[%s173 + $0x310] sm:$0xff] %vm1547, %v1520
        %1647 = vst.msk [vmem:[%s173 + $0x318] sm:$0xff] %vm1547, %v1522
        %1648 = vst.msk [vmem:[%s173 + $0x320] sm:$0xff] %vm1547, %v1524
        %1649 = vst.msk [vmem:[%s173 + $0x328] sm:$0xff] %vm1547, %v1526
        %1650 = vst.msk [vmem:[%s173 + $0x330] sm:$0xff] %vm1547, %v1528
        %1651 = vst.msk [vmem:[%s173 + $0x338] sm:$0xff] %vm1547, %v1530
        %1652 = vst.msk [vmem:[%s173 + $0x340] sm:$0xff] %vm1547, %v1532
        %1653 = vst.msk [vmem:[%s173 + $0x348] sm:$0xff] %vm1547, %v1534
        %1654 = vst.msk [vmem:[%s173 + $0x350] sm:$0xff] %vm1547, %v1536
        %1655 = vst.msk [vmem:[%s173 + $0x358] sm:$0xff] %vm1547, %v1538
        %1656 = vst.msk [vmem:[%s173 + $0x360] sm:$0xff] %vm1547, %v1540
        %1657 = vst.msk [vmem:[%s173 + $0x368] sm:$0xff] %vm1547, %v1542
        %1658 = vst.msk [vmem:[%s173 + $0x370] sm:$0xff] %vm1547, %v1544
        %1659 = vst.msk [vmem:[%s173 + $0x378] sm:$0xff] %vm1547, %v1546
        %s1660 = sand.u32 %s91, 1
        %s1661 = sand.u32 %s91, 1
        %s1662 = smul.addr %s1661, 896
        %s1663 = scalar_lea.vmem [#allocation3], %s1662
        // Predicated region
        $region33: #{tpu_custom_call.1} parent=31 // pred_check
          %p1664 = pneg %p101
        $region34: #{tpu_custom_call.1} parent=31 // pred_check_branch
          %1666 = sbr.rel (%p1664) target = $region36
        $region35: #{tpu_custom_call.1} parent=31 // pred_region
          %s1667 = smul.u32 112, %s15
          %s1668 = ssub.s32 250, %s1667
          %p1669 = scmp.lt.s32.totalorder %s1668, 112
          %s1670 = scalar_select %p1669, %s1668, 112
          %s1671 = smul.u32 128, %s1670
          %p1672 = scmp.ne.s32.totalorder 0, %s1671
          %s1673 = smul.addr %s1667, 8
          %s1674 = scalar_lea.vmem %s3, %s1673
          // Predicated region
          $region37: #{tpu_custom_call.1} parent=35 // pred_check
            %p1675 = pneg %p1672
          $region38: #{tpu_custom_call.1} parent=35 // pred_check_branch
            %1677 = sbr.rel (%p1675) target = $region40
          $region39: #{tpu_custom_call.1} parent=35 // pred_region
            // Predicated region
            $region41: #{tpu_custom_call.1} parent=39 // pred_check
              _
            $region42: #{tpu_custom_call.1} parent=39 // pred_check_branch
              %1679 = sbr.rel (0) target = $region44
            $region43: #{tpu_custom_call.1} parent=39 // pred_region
              // Predicated region
              $region63: #{tpu_custom_call.1} parent=43 // pred_check
                _
              $region64: #{tpu_custom_call.1} parent=43 // pred_check_branch
                %1854 = sbr.rel (0) target = $region66
              $region65: #{tpu_custom_call.1} parent=43 // pred_region
                %s1855 = sshrl.u32 %s1670, 6
                // While loop
                $region67: #{tpu_custom_call.1} parent=65 // loop_pre_header
                  _
                $region68: #{tpu_custom_call.1} parent=65 // loop_header
                  %s1857 = sphi 0, %s1859
                  %p1858 = scmp.ge.s32.totalorder %s1857, %s1855
                  %s1862 = sphi 0, %s1995
                  %s1863 = sphi %s1663, %s1998
                  %s1864 = sphi %s1674, %s1999
                $region69: #{tpu_custom_call.1} parent=65 // loop_header_branch
                  %1861 = sbr.rel (%p1858) target = $region73
                $region70: #{tpu_custom_call.1} parent=65 // loop_body
                  %v1865 = vld [vmem:[%s1863] sm:$0xff]
                  %1866 = vst [vmem:[%s1864] sm:$0xff] %v1865
                  %v1867 = vld [vmem:[%s1863 + $0x8] sm:$0xff]
                  %1868 = vst [vmem:[%s1864 + $0x8] sm:$0xff] %v1867
                  %v1869 = vld [vmem:[%s1863 + $0x10] sm:$0xff]
                  %1870 = vst [vmem:[%s1864 + $0x10] sm:$0xff] %v1869
                  %v1871 = vld [vmem:[%s1863 + $0x18] sm:$0xff]
                  %1872 = vst [vmem:[%s1864 + $0x18] sm:$0xff] %v1871
                  %v1873 = vld [vmem:[%s1863 + $0x20] sm:$0xff]
                  %1874 = vst [vmem:[%s1864 + $0x20] sm:$0xff] %v1873
                  %v1875 = vld [vmem:[%s1863 + $0x28] sm:$0xff]
                  %1876 = vst [vmem:[%s1864 + $0x28] sm:$0xff] %v1875
                  %v1877 = vld [vmem:[%s1863 + $0x30] sm:$0xff]
                  %1878 = vst [vmem:[%s1864 + $0x30] sm:$0xff] %v1877
                  %v1879 = vld [vmem:[%s1863 + $0x38] sm:$0xff]
                  %1880 = vst [vmem:[%s1864 + $0x38] sm:$0xff] %v1879
                  %v1881 = vld [vmem:[%s1863 + $0x40] sm:$0xff]
                  %1882 = vst [vmem:[%s1864 + $0x40] sm:$0xff] %v1881
                  %v1883 = vld [vmem:[%s1863 + $0x48] sm:$0xff]
                  %1884 = vst [vmem:[%s1864 + $0x48] sm:$0xff] %v1883
                  %v1885 = vld [vmem:[%s1863 + $0x50] sm:$0xff]
                  %1886 = vst [vmem:[%s1864 + $0x50] sm:$0xff] %v1885
                  %v1887 = vld [vmem:[%s1863 + $0x58] sm:$0xff]
                  %1888 = vst [vmem:[%s1864 + $0x58] sm:$0xff] %v1887
                  %v1889 = vld [vmem:[%s1863 + $0x60] sm:$0xff]
                  %1890 = vst [vmem:[%s1864 + $0x60] sm:$0xff] %v1889
                  %v1891 = vld [vmem:[%s1863 + $0x68] sm:$0xff]
                  %1892 = vst [vmem:[%s1864 + $0x68] sm:$0xff] %v1891
                  %v1893 = vld [vmem:[%s1863 + $0x70] sm:$0xff]
                  %1894 = vst [vmem:[%s1864 + $0x70] sm:$0xff] %v1893
                  %v1895 = vld [vmem:[%s1863 + $0x78] sm:$0xff]
                  %1896 = vst [vmem:[%s1864 + $0x78] sm:$0xff] %v1895
                  %v1897 = vld [vmem:[%s1863 + $0x80] sm:$0xff]
                  %1898 = vst [vmem:[%s1864 + $0x80] sm:$0xff] %v1897
                  %v1899 = vld [vmem:[%s1863 + $0x88] sm:$0xff]
                  %1900 = vst [vmem:[%s1864 + $0x88] sm:$0xff] %v1899
                  %v1901 = vld [vmem:[%s1863 + $0x90] sm:$0xff]
                  %1902 = vst [vmem:[%s1864 + $0x90] sm:$0xff] %v1901
                  %v1903 = vld [vmem:[%s1863 + $0x98] sm:$0xff]
                  %1904 = vst [vmem:[%s1864 + $0x98] sm:$0xff] %v1903
                  %v1905 = vld [vmem:[%s1863 + $0xa0] sm:$0xff]
                  %1906 = vst [vmem:[%s1864 + $0xa0] sm:$0xff] %v1905
                  %v1907 = vld [vmem:[%s1863 + $0xa8] sm:$0xff]
                  %1908 = vst [vmem:[%s1864 + $0xa8] sm:$0xff] %v1907
                  %v1909 = vld [vmem:[%s1863 + $0xb0] sm:$0xff]
                  %1910 = vst [vmem:[%s1864 + $0xb0] sm:$0xff] %v1909
                  %v1911 = vld [vmem:[%s1863 + $0xb8] sm:$0xff]
                  %1912 = vst [vmem:[%s1864 + $0xb8] sm:$0xff] %v1911
                  %v1913 = vld [vmem:[%s1863 + $0xc0] sm:$0xff]
                  %1914 = vst [vmem:[%s1864 + $0xc0] sm:$0xff] %v1913
                  %v1915 = vld [vmem:[%s1863 + $0xc8] sm:$0xff]
                  %1916 = vst [vmem:[%s1864 + $0xc8] sm:$0xff] %v1915
                  %v1917 = vld [vmem:[%s1863 + $0xd0] sm:$0xff]
                  %1918 = vst [vmem:[%s1864 + $0xd0] sm:$0xff] %v1917
                  %v1919 = vld [vmem:[%s1863 + $0xd8] sm:$0xff]
                  %1920 = vst [vmem:[%s1864 + $0xd8] sm:$0xff] %v1919
                  %v1921 = vld [vmem:[%s1863 + $0xe0] sm:$0xff]
                  %1922 = vst [vmem:[%s1864 + $0xe0] sm:$0xff] %v1921
                  %v1923 = vld [vmem:[%s1863 + $0xe8] sm:$0xff]
                  %1924 = vst [vmem:[%s1864 + $0xe8] sm:$0xff] %v1923
                  %v1925 = vld [vmem:[%s1863 + $0xf0] sm:$0xff]
                  %1926 = vst [vmem:[%s1864 + $0xf0] sm:$0xff] %v1925
                  %v1927 = vld [vmem:[%s1863 + $0xf8] sm:$0xff]
                  %1928 = vst [vmem:[%s1864 + $0xf8] sm:$0xff] %v1927
                  %v1929 = vld [vmem:[%s1863 + $0x100] sm:$0xff]
                  %1930 = vst [vmem:[%s1864 + $0x100] sm:$0xff] %v1929
                  %v1931 = vld [vmem:[%s1863 + $0x108] sm:$0xff]
                  %1932 = vst [vmem:[%s1864 + $0x108] sm:$0xff] %v1931
                  %v1933 = vld [vmem:[%s1863 + $0x110] sm:$0xff]
                  %1934 = vst [vmem:[%s1864 + $0x110] sm:$0xff] %v1933
                  %v1935 = vld [vmem:[%s1863 + $0x118] sm:$0xff]
                  %1936 = vst [vmem:[%s1864 + $0x118] sm:$0xff] %v1935
                  %v1937 = vld [vmem:[%s1863 + $0x120] sm:$0xff]
                  %1938 = vst [vmem:[%s1864 + $0x120] sm:$0xff] %v1937
                  %v1939 = vld [vmem:[%s1863 + $0x128] sm:$0xff]
                  %1940 = vst [vmem:[%s1864 + $0x128] sm:$0xff] %v1939
                  %v1941 = vld [vmem:[%s1863 + $0x130] sm:$0xff]
                  %1942 = vst [vmem:[%s1864 + $0x130] sm:$0xff] %v1941
                  %v1943 = vld [vmem:[%s1863 + $0x138] sm:$0xff]
                  %1944 = vst [vmem:[%s1864 + $0x138] sm:$0xff] %v1943
                  %v1945 = vld [vmem:[%s1863 + $0x140] sm:$0xff]
                  %1946 = vst [vmem:[%s1864 + $0x140] sm:$0xff] %v1945
                  %v1947 = vld [vmem:[%s1863 + $0x148] sm:$0xff]
                  %1948 = vst [vmem:[%s1864 + $0x148] sm:$0xff] %v1947
                  %v1949 = vld [vmem:[%s1863 + $0x150] sm:$0xff]
                  %1950 = vst [vmem:[%s1864 + $0x150] sm:$0xff] %v1949
                  %v1951 = vld [vmem:[%s1863 + $0x158] sm:$0xff]
                  %1952 = vst [vmem:[%s1864 + $0x158] sm:$0xff] %v1951
                  %v1953 = vld [vmem:[%s1863 + $0x160] sm:$0xff]
                  %1954 = vst [vmem:[%s1864 + $0x160] sm:$0xff] %v1953
                  %v1955 = vld [vmem:[%s1863 + $0x168] sm:$0xff]
                  %1956 = vst [vmem:[%s1864 + $0x168] sm:$0xff] %v1955
                  %v1957 = vld [vmem:[%s1863 + $0x170] sm:$0xff]
                  %1958 = vst [vmem:[%s1864 + $0x170] sm:$0xff] %v1957
                  %v1959 = vld [vmem:[%s1863 + $0x178] sm:$0xff]
                  %1960 = vst [vmem:[%s1864 + $0x178] sm:$0xff] %v1959
                  %v1961 = vld [vmem:[%s1863 + $0x180] sm:$0xff]
                  %1962 = vst [vmem:[%s1864 + $0x180] sm:$0xff] %v1961
                  %v1963 = vld [vmem:[%s1863 + $0x188] sm:$0xff]
                  %1964 = vst [vmem:[%s1864 + $0x188] sm:$0xff] %v1963
                  %v1965 = vld [vmem:[%s1863 + $0x190] sm:$0xff]
                  %1966 = vst [vmem:[%s1864 + $0x190] sm:$0xff] %v1965
                  %v1967 = vld [vmem:[%s1863 + $0x198] sm:$0xff]
                  %1968 = vst [vmem:[%s1864 + $0x198] sm:$0xff] %v1967
                  %v1969 = vld [vmem:[%s1863 + $0x1a0] sm:$0xff]
                  %1970 = vst [vmem:[%s1864 + $0x1a0] sm:$0xff] %v1969
                  %v1971 = vld [vmem:[%s1863 + $0x1a8] sm:$0xff]
                  %1972 = vst [vmem:[%s1864 + $0x1a8] sm:$0xff] %v1971
                  %v1973 = vld [vmem:[%s1863 + $0x1b0] sm:$0xff]
                  %1974 = vst [vmem:[%s1864 + $0x1b0] sm:$0xff] %v1973
                  %v1975 = vld [vmem:[%s1863 + $0x1b8] sm:$0xff]
                  %1976 = vst [vmem:[%s1864 + $0x1b8] sm:$0xff] %v1975
                  %v1977 = vld [vmem:[%s1863 + $0x1c0] sm:$0xff]
                  %1978 = vst [vmem:[%s1864 + $0x1c0] sm:$0xff] %v1977
                  %v1979 = vld [vmem:[%s1863 + $0x1c8] sm:$0xff]
                  %1980 = vst [vmem:[%s1864 + $0x1c8] sm:$0xff] %v1979
                  %v1981 = vld [vmem:[%s1863 + $0x1d0] sm:$0xff]
                  %1982 = vst [vmem:[%s1864 + $0x1d0] sm:$0xff] %v1981
                  %v1983 = vld [vmem:[%s1863 + $0x1d8] sm:$0xff]
                  %1984 = vst [vmem:[%s1864 + $0x1d8] sm:$0xff] %v1983
                  %v1985 = vld [vmem:[%s1863 + $0x1e0] sm:$0xff]
                  %1986 = vst [vmem:[%s1864 + $0x1e0] sm:$0xff] %v1985
                  %v1987 = vld [vmem:[%s1863 + $0x1e8] sm:$0xff]
                  %1988 = vst [vmem:[%s1864 + $0x1e8] sm:$0xff] %v1987
                  %v1989 = vld [vmem:[%s1863 + $0x1f0] sm:$0xff]
                  %1990 = vst [vmem:[%s1864 + $0x1f0] sm:$0xff] %v1989
                  %v1991 = vld [vmem:[%s1863 + $0x1f8] sm:$0xff]
                  %1992 = vst [vmem:[%s1864 + $0x1f8] sm:$0xff] %v1991
                  %s1993 = sadd.s32 1, %s1862
                  %p1994 = scmp.ge.s32.totalorder %s1993, %s1855
                  %s1995 = scalar_select %p1994, 0, %s1993
                  %s1996 = smul.u32 %s1995, 512
                  %s1997 = smul.u32 %s1995, 512
                  %s1998 = scalar_lea.vmem %s1663, %s1996 [#allocation3]
                  %s1999 = scalar_lea.vmem %s1674, %s1997
                $region71: #{tpu_custom_call.1} parent=65 // loop_footer
                  %s1859 = sadd.s32 %s1857, 1
                $region72: #{tpu_custom_call.1} parent=65 // loop_footer_branch
                  %1856 = sbr.rel target = $region68
                $region73: #{tpu_custom_call.1} parent=65 // loop_exit
                  _
                %s2000 = sshrl.u32 %s1670, 6
                %s2001 = sand.u32 %s1670, 63
                %s2002 = smul.u32 %s2000, 64
                %s2003 = smul.u32 8, %s2002
                %s2004 = scalar_lea.vmem %s1663, %s2003 [#allocation3]
                %s2005 = smul.u32 8, %s2002
                %s2006 = scalar_lea.vmem %s1674, %s2005
                // While loop
                $region74: #{tpu_custom_call.1} parent=65 // loop_pre_header
                  _
                $region75: #{tpu_custom_call.1} parent=65 // loop_header
                  %s2008 = sphi 0, %s2010
                  %p2009 = scmp.ge.s32.totalorder %s2008, %s2001
                  %s2013 = sphi 0, %s2020
                  %s2014 = sphi %s2004, %s2023
                  %s2015 = sphi %s2006, %s2024
                $region76: #{tpu_custom_call.1} parent=65 // loop_header_branch
                  %2012 = sbr.rel (%p2009) target = $region80
                $region77: #{tpu_custom_call.1} parent=65 // loop_body
                  %v2016 = vld [vmem:[%s2014] sm:$0xff]
                  %2017 = vst [vmem:[%s2015] sm:$0xff] %v2016
                  %s2018 = sadd.s32 1, %s2013
                  %p2019 = scmp.ge.s32.totalorder %s2018, %s2001
                  %s2020 = scalar_select %p2019, 0, %s2018
                  %s2021 = smul.u32 %s2020, 8
                  %s2022 = smul.u32 %s2020, 8
                  %s2023 = scalar_lea.vmem %s2004, %s2021 [#allocation3]
                  %s2024 = scalar_lea.vmem %s2006, %s2022
                $region78: #{tpu_custom_call.1} parent=65 // loop_footer
                  %s2010 = sadd.s32 %s2008, 1
                $region79: #{tpu_custom_call.1} parent=65 // loop_footer_branch
                  %2007 = sbr.rel target = $region75
                $region80: #{tpu_custom_call.1} parent=65 // loop_exit
                  _
              $region66: #{tpu_custom_call.1} parent=43 // pred_fallthru
                _
              // Predicated region
              $region81: #{tpu_custom_call.1} parent=43 // pred_check
                _
              $region82: #{tpu_custom_call.1} parent=43 // pred_check_branch
                %2026 = sbr.rel target = $region84
              $region83: #{tpu_custom_call.1} parent=43 // pred_region
                _
              $region84: #{tpu_custom_call.1} parent=43 // pred_fallthru
                _
            $region44: #{tpu_custom_call.1} parent=39 // pred_fallthru
              _
            // Predicated region
            $region45: #{tpu_custom_call.1} parent=39 // pred_check
              _
            $region46: #{tpu_custom_call.1} parent=39 // pred_check_branch
              %1681 = sbr.rel target = $region48
            $region47: #{tpu_custom_call.1} parent=39 // pred_region
              %s1683 = sshrl.u32 %s1670, 6
              // While loop
              $region49: #{tpu_custom_call.1} parent=47 // loop_pre_header
                _
              $region50: #{tpu_custom_call.1} parent=47 // loop_header
                %s1685 = sphi 0, %s1687
                %p1686 = scmp.ge.s32.totalorder %s1685, %s1683
                %s1690 = sphi 0, %s1823
                %s1691 = sphi %s1663, %s1826
                %s1692 = sphi %s1674, %s1827
              $region51: #{tpu_custom_call.1} parent=47 // loop_header_branch
                %1689 = sbr.rel (%p1686) target = $region55
              $region52: #{tpu_custom_call.1} parent=47 // loop_body
                %v1693 = vld [vmem:[%s1691] sm:$0xff]
                %1694 = vst [vmem:[%s1692] sm:$0xff] %v1693
                %v1695 = vld [vmem:[%s1691 + $0x8] sm:$0xff]
                %1696 = vst [vmem:[%s1692 + $0x8] sm:$0xff] %v1695
                %v1697 = vld [vmem:[%s1691 + $0x10] sm:$0xff]
                %1698 = vst [vmem:[%s1692 + $0x10] sm:$0xff] %v1697
                %v1699 = vld [vmem:[%s1691 + $0x18] sm:$0xff]
                %1700 = vst [vmem:[%s1692 + $0x18] sm:$0xff] %v1699
                %v1701 = vld [vmem:[%s1691 + $0x20] sm:$0xff]
                %1702 = vst [vmem:[%s1692 + $0x20] sm:$0xff] %v1701
                %v1703 = vld [vmem:[%s1691 + $0x28] sm:$0xff]
                %1704 = vst [vmem:[%s1692 + $0x28] sm:$0xff] %v1703
                %v1705 = vld [vmem:[%s1691 + $0x30] sm:$0xff]
                %1706 = vst [vmem:[%s1692 + $0x30] sm:$0xff] %v1705
                %v1707 = vld [vmem:[%s1691 + $0x38] sm:$0xff]
                %1708 = vst [vmem:[%s1692 + $0x38] sm:$0xff] %v1707
                %v1709 = vld [vmem:[%s1691 + $0x40] sm:$0xff]
                %1710 = vst [vmem:[%s1692 + $0x40] sm:$0xff] %v1709
                %v1711 = vld [vmem:[%s1691 + $0x48] sm:$0xff]
                %1712 = vst [vmem:[%s1692 + $0x48] sm:$0xff] %v1711
                %v1713 = vld [vmem:[%s1691 + $0x50] sm:$0xff]
                %1714 = vst [vmem:[%s1692 + $0x50] sm:$0xff] %v1713
                %v1715 = vld [vmem:[%s1691 + $0x58] sm:$0xff]
                %1716 = vst [vmem:[%s1692 + $0x58] sm:$0xff] %v1715
                %v1717 = vld [vmem:[%s1691 + $0x60] sm:$0xff]
                %1718 = vst [vmem:[%s1692 + $0x60] sm:$0xff] %v1717
                %v1719 = vld [vmem:[%s1691 + $0x68] sm:$0xff]
                %1720 = vst [vmem:[%s1692 + $0x68] sm:$0xff] %v1719
                %v1721 = vld [vmem:[%s1691 + $0x70] sm:$0xff]
                %1722 = vst [vmem:[%s1692 + $0x70] sm:$0xff] %v1721
                %v1723 = vld [vmem:[%s1691 + $0x78] sm:$0xff]
                %1724 = vst [vmem:[%s1692 + $0x78] sm:$0xff] %v1723
                %v1725 = vld [vmem:[%s1691 + $0x80] sm:$0xff]
                %1726 = vst [vmem:[%s1692 + $0x80] sm:$0xff] %v1725
                %v1727 = vld [vmem:[%s1691 + $0x88] sm:$0xff]
                %1728 = vst [vmem:[%s1692 + $0x88] sm:$0xff] %v1727
                %v1729 = vld [vmem:[%s1691 + $0x90] sm:$0xff]
                %1730 = vst [vmem:[%s1692 + $0x90] sm:$0xff] %v1729
                %v1731 = vld [vmem:[%s1691 + $0x98] sm:$0xff]
                %1732 = vst [vmem:[%s1692 + $0x98] sm:$0xff] %v1731
                %v1733 = vld [vmem:[%s1691 + $0xa0] sm:$0xff]
                %1734 = vst [vmem:[%s1692 + $0xa0] sm:$0xff] %v1733
                %v1735 = vld [vmem:[%s1691 + $0xa8] sm:$0xff]
                %1736 = vst [vmem:[%s1692 + $0xa8] sm:$0xff] %v1735
                %v1737 = vld [vmem:[%s1691 + $0xb0] sm:$0xff]
                %1738 = vst [vmem:[%s1692 + $0xb0] sm:$0xff] %v1737
                %v1739 = vld [vmem:[%s1691 + $0xb8] sm:$0xff]
                %1740 = vst [vmem:[%s1692 + $0xb8] sm:$0xff] %v1739
                %v1741 = vld [vmem:[%s1691 + $0xc0] sm:$0xff]
                %1742 = vst [vmem:[%s1692 + $0xc0] sm:$0xff] %v1741
                %v1743 = vld [vmem:[%s1691 + $0xc8] sm:$0xff]
                %1744 = vst [vmem:[%s1692 + $0xc8] sm:$0xff] %v1743
                %v1745 = vld [vmem:[%s1691 + $0xd0] sm:$0xff]
                %1746 = vst [vmem:[%s1692 + $0xd0] sm:$0xff] %v1745
                %v1747 = vld [vmem:[%s1691 + $0xd8] sm:$0xff]
                %1748 = vst [vmem:[%s1692 + $0xd8] sm:$0xff] %v1747
                %v1749 = vld [vmem:[%s1691 + $0xe0] sm:$0xff]
                %1750 = vst [vmem:[%s1692 + $0xe0] sm:$0xff] %v1749
                %v1751 = vld [vmem:[%s1691 + $0xe8] sm:$0xff]
                %1752 = vst [vmem:[%s1692 + $0xe8] sm:$0xff] %v1751
                %v1753 = vld [vmem:[%s1691 + $0xf0] sm:$0xff]
                %1754 = vst [vmem:[%s1692 + $0xf0] sm:$0xff] %v1753
                %v1755 = vld [vmem:[%s1691 + $0xf8] sm:$0xff]
                %1756 = vst [vmem:[%s1692 + $0xf8] sm:$0xff] %v1755
                %v1757 = vld [vmem:[%s1691 + $0x100] sm:$0xff]
                %1758 = vst [vmem:[%s1692 + $0x100] sm:$0xff] %v1757
                %v1759 = vld [vmem:[%s1691 + $0x108] sm:$0xff]
                %1760 = vst [vmem:[%s1692 + $0x108] sm:$0xff] %v1759
                %v1761 = vld [vmem:[%s1691 + $0x110] sm:$0xff]
                %1762 = vst [vmem:[%s1692 + $0x110] sm:$0xff] %v1761
                %v1763 = vld [vmem:[%s1691 + $0x118] sm:$0xff]
                %1764 = vst [vmem:[%s1692 + $0x118] sm:$0xff] %v1763
                %v1765 = vld [vmem:[%s1691 + $0x120] sm:$0xff]
                %1766 = vst [vmem:[%s1692 + $0x120] sm:$0xff] %v1765
                %v1767 = vld [vmem:[%s1691 + $0x128] sm:$0xff]
                %1768 = vst [vmem:[%s1692 + $0x128] sm:$0xff] %v1767
                %v1769 = vld [vmem:[%s1691 + $0x130] sm:$0xff]
                %1770 = vst [vmem:[%s1692 + $0x130] sm:$0xff] %v1769
                %v1771 = vld [vmem:[%s1691 + $0x138] sm:$0xff]
                %1772 = vst [vmem:[%s1692 + $0x138] sm:$0xff] %v1771
                %v1773 = vld [vmem:[%s1691 + $0x140] sm:$0xff]
                %1774 = vst [vmem:[%s1692 + $0x140] sm:$0xff] %v1773
                %v1775 = vld [vmem:[%s1691 + $0x148] sm:$0xff]
                %1776 = vst [vmem:[%s1692 + $0x148] sm:$0xff] %v1775
                %v1777 = vld [vmem:[%s1691 + $0x150] sm:$0xff]
                %1778 = vst [vmem:[%s1692 + $0x150] sm:$0xff] %v1777
                %v1779 = vld [vmem:[%s1691 + $0x158] sm:$0xff]
                %1780 = vst [vmem:[%s1692 + $0x158] sm:$0xff] %v1779
                %v1781 = vld [vmem:[%s1691 + $0x160] sm:$0xff]
                %1782 = vst [vmem:[%s1692 + $0x160] sm:$0xff] %v1781
                %v1783 = vld [vmem:[%s1691 + $0x168] sm:$0xff]
                %1784 = vst [vmem:[%s1692 + $0x168] sm:$0xff] %v1783
                %v1785 = vld [vmem:[%s1691 + $0x170] sm:$0xff]
                %1786 = vst [vmem:[%s1692 + $0x170] sm:$0xff] %v1785
                %v1787 = vld [vmem:[%s1691 + $0x178] sm:$0xff]
                %1788 = vst [vmem:[%s1692 + $0x178] sm:$0xff] %v1787
                %v1789 = vld [vmem:[%s1691 + $0x180] sm:$0xff]
                %1790 = vst [vmem:[%s1692 + $0x180] sm:$0xff] %v1789
                %v1791 = vld [vmem:[%s1691 + $0x188] sm:$0xff]
                %1792 = vst [vmem:[%s1692 + $0x188] sm:$0xff] %v1791
                %v1793 = vld [vmem:[%s1691 + $0x190] sm:$0xff]
                %1794 = vst [vmem:[%s1692 + $0x190] sm:$0xff] %v1793
                %v1795 = vld [vmem:[%s1691 + $0x198] sm:$0xff]
                %1796 = vst [vmem:[%s1692 + $0x198] sm:$0xff] %v1795
                %v1797 = vld [vmem:[%s1691 + $0x1a0] sm:$0xff]
                %1798 = vst [vmem:[%s1692 + $0x1a0] sm:$0xff] %v1797
                %v1799 = vld [vmem:[%s1691 + $0x1a8] sm:$0xff]
                %1800 = vst [vmem:[%s1692 + $0x1a8] sm:$0xff] %v1799
                %v1801 = vld [vmem:[%s1691 + $0x1b0] sm:$0xff]
                %1802 = vst [vmem:[%s1692 + $0x1b0] sm:$0xff] %v1801
                %v1803 = vld [vmem:[%s1691 + $0x1b8] sm:$0xff]
                %1804 = vst [vmem:[%s1692 + $0x1b8] sm:$0xff] %v1803
                %v1805 = vld [vmem:[%s1691 + $0x1c0] sm:$0xff]
                %1806 = vst [vmem:[%s1692 + $0x1c0] sm:$0xff] %v1805
                %v1807 = vld [vmem:[%s1691 + $0x1c8] sm:$0xff]
                %1808 = vst [vmem:[%s1692 + $0x1c8] sm:$0xff] %v1807
                %v1809 = vld [vmem:[%s1691 + $0x1d0] sm:$0xff]
                %1810 = vst [vmem:[%s1692 + $0x1d0] sm:$0xff] %v1809
                %v1811 = vld [vmem:[%s1691 + $0x1d8] sm:$0xff]
                %1812 = vst [vmem:[%s1692 + $0x1d8] sm:$0xff] %v1811
                %v1813 = vld [vmem:[%s1691 + $0x1e0] sm:$0xff]
                %1814 = vst [vmem:[%s1692 + $0x1e0] sm:$0xff] %v1813
                %v1815 = vld [vmem:[%s1691 + $0x1e8] sm:$0xff]
                %1816 = vst [vmem:[%s1692 + $0x1e8] sm:$0xff] %v1815
                %v1817 = vld [vmem:[%s1691 + $0x1f0] sm:$0xff]
                %1818 = vst [vmem:[%s1692 + $0x1f0] sm:$0xff] %v1817
                %v1819 = vld [vmem:[%s1691 + $0x1f8] sm:$0xff]
                %1820 = vst [vmem:[%s1692 + $0x1f8] sm:$0xff] %v1819
                %s1821 = sadd.s32 1, %s1690
                %p1822 = scmp.ge.s32.totalorder %s1821, %s1683
                %s1823 = scalar_select %p1822, 0, %s1821
                %s1824 = smul.u32 %s1823, 512
                %s1825 = smul.u32 %s1823, 512
                %s1826 = scalar_lea.vmem %s1663, %s1824 [#allocation3]
                %s1827 = scalar_lea.vmem %s1674, %s1825
              $region53: #{tpu_custom_call.1} parent=47 // loop_footer
                %s1687 = sadd.s32 %s1685, 1
              $region54: #{tpu_custom_call.1} parent=47 // loop_footer_branch
                %1684 = sbr.rel target = $region50
              $region55: #{tpu_custom_call.1} parent=47 // loop_exit
                _
              %s1828 = sshrl.u32 %s1670, 6
              %s1829 = sand.u32 %s1670, 63
              %s1830 = smul.u32 %s1828, 64
              %s1831 = smul.u32 8, %s1830
              %s1832 = scalar_lea.vmem %s1663, %s1831 [#allocation3]
              %s1833 = smul.u32 8, %s1830
              %s1834 = scalar_lea.vmem %s1674, %s1833
              // While loop
              $region56: #{tpu_custom_call.1} parent=47 // loop_pre_header
                _
              $region57: #{tpu_custom_call.1} parent=47 // loop_header
                %s1836 = sphi 0, %s1838
                %p1837 = scmp.ge.s32.totalorder %s1836, %s1829
                %s1841 = sphi 0, %s1848
                %s1842 = sphi %s1832, %s1851
                %s1843 = sphi %s1834, %s1852
              $region58: #{tpu_custom_call.1} parent=47 // loop_header_branch
                %1840 = sbr.rel (%p1837) target = $region62
              $region59: #{tpu_custom_call.1} parent=47 // loop_body
                %v1844 = vld [vmem:[%s1842] sm:$0xff]
                %1845 = vst [vmem:[%s1843] sm:$0xff] %v1844
                %s1846 = sadd.s32 1, %s1841
                %p1847 = scmp.ge.s32.totalorder %s1846, %s1829
                %s1848 = scalar_select %p1847, 0, %s1846
                %s1849 = smul.u32 %s1848, 8
                %s1850 = smul.u32 %s1848, 8
                %s1851 = scalar_lea.vmem %s1832, %s1849 [#allocation3]
                %s1852 = scalar_lea.vmem %s1834, %s1850
              $region60: #{tpu_custom_call.1} parent=47 // loop_footer
                %s1838 = sadd.s32 %s1836, 1
              $region61: #{tpu_custom_call.1} parent=47 // loop_footer_branch
                %1835 = sbr.rel target = $region57
              $region62: #{tpu_custom_call.1} parent=47 // loop_exit
                _
            $region48: #{tpu_custom_call.1} parent=39 // pred_fallthru
              _
          $region40: #{tpu_custom_call.1} parent=35 // pred_fallthru
            _
          %2027 = vnop
        $region36: #{tpu_custom_call.1} parent=31 // pred_fallthru
          _
      $region32: #{tpu_custom_call.1} parent=5 // pred_fallthru
        _
      %p2028 = scmp.le.s32.totalorder 2, %s10
      // Predicated region
      $region85: #{tpu_custom_call.1} parent=5 // pred_check
        %p2029 = pneg %p2028
      $region86: #{tpu_custom_call.1} parent=5 // pred_check_branch
        %2031 = sbr.rel (%p2029) target = $region88
      $region87: #{tpu_custom_call.1} parent=5 // pred_region
        %s2032 = ssub.s32 %s10, 2
        // Predicated region
        $region89: #{tpu_custom_call.1} parent=87 // pred_check
          %p2033 = pneg %p107
        $region90: #{tpu_custom_call.1} parent=87 // pred_check_branch
          %2035 = sbr.rel (%p2033) target = $region92
        $region91: #{tpu_custom_call.1} parent=87 // pred_region
          %s2036 = sand.u32 %s92, 1
          %s2037 = sand.u32 %s92, 1
          %s2038 = smul.addr %s2037, 896
          %s2039 = scalar_lea.vmem [#allocation3], %s2038
        $region92: #{tpu_custom_call.1} parent=87 // pred_fallthru
          _
      $region88: #{tpu_custom_call.1} parent=5 // pred_fallthru
        _
    $region6: #{tpu_custom_call.1} parent=1 // loop_footer
      %s14 = sadd.s32 1, %s10
    $region7: #{tpu_custom_call.1} parent=1 // loop_footer_branch
      %9 = sbr.rel target = $region3
    $region8: #{tpu_custom_call.1} parent=1 // loop_exit
      _

</llo_original>
